<compile_context>
chip_gen: v5e
topology: v5e:2x2
jax: 0.10.0
libtpu: 0.0.40
codegen_flags: <defaults>
</compile_context>

<pallas_src>
import functools
import math

import jax
import jax.numpy as jnp
from jax import lax
from jax.experimental import pallas as pl
from jax.experimental.pallas import tpu as pltpu

LANE = 128


def _round_up(x, m):
    return (x + m - 1) // m * m


def _tree_attn_lstm_kernel(
    tidx_ref, x_ref, h_ref, c_ref,
    wx_ref, bx_ref, wh_ref, bh_ref, wiouh_ref,
    hc_out_ref,
    *, kp, hp, scale,
):
    f32 = jnp.float32
    bf16 = jnp.bfloat16
    tp = x_ref.shape[0]        # parent tile rows
    n = h_ref.shape[0]         # padded number of child slots

    x = x_ref[...]             # (TP, E)   bf16
    h = h_ref[...]             # (N, HP)   bf16
    c = c_ref[...]             # (N, HP)   bf16
    tidx = tidx_ref[...]       # (1, N)    int32 (padded slots hold -1)

    # --- membership mask for this tile of parents (built in-kernel, no HBM M) ---
    row_ids = (lax.broadcasted_iota(jnp.int32, (tp, n), 0)
               + pl.program_id(0) * tp)              # global parent id per row
    m_bool = row_ids == tidx                         # (TP, N)
    m_f32 = m_bool.astype(f32)
    m_bf = m_bool.astype(bf16)

    # --- fused x-side projections: [ q | fx | i | o | u ] (lane-aligned) --------
    xproj = jnp.dot(x, wx_ref[...], preferred_element_type=f32) + bx_ref[...]
    q = xproj[:, 0:kp]                               # (TP, KP)
    fx_x = xproj[:, kp:kp + hp]                      # (TP, HP)
    iou_x = xproj[:, kp + hp:kp + 4 * hp]            # (TP, 3*HP)

    # --- fused h-side projections: [ k | fh ] ------------------------------------
    hproj = jnp.dot(h, wh_ref[...], preferred_element_type=f32) + bh_ref[...]
    k = hproj[:, 0:kp]                               # (N, KP)
    fh_h = hproj[:, kp:kp + hp]                      # (N, HP)

    # --- scaled dot-product attention over each parent's children ----------------
    s = lax.dot_general(q.astype(bf16), k.astype(bf16),
                        (((1,), (1,)), ((), ())),
                        preferred_element_type=f32) * jnp.float32(scale)  # (TP, N)
    s = jnp.where(m_bool, s, jnp.float32(-1e30))
    s_max = jnp.max(s, axis=1, keepdims=True)
    p = jnp.exp(s - s_max) * m_f32
    denom = jnp.maximum(jnp.sum(p, axis=1, keepdims=True), jnp.float32(1e-30))
    attn = p * pl.reciprocal(denom, approx=True)
    h_sum = jnp.dot(attn.astype(bf16), h, preferred_element_type=f32)     # (TP, HP)

    # --- i / o / u gates (each gate occupies its own 128-lane segment) -----------
    iou = iou_x + jnp.dot(h_sum.astype(bf16), wiouh_ref[...],
                          preferred_element_type=f32)                     # (TP, 3HP)
    i_g = jax.nn.sigmoid(iou[:, 0:hp])
    o_g = jax.nn.sigmoid(iou[:, hp:2 * hp])
    u_g = jnp.tanh(iou[:, 2 * hp:3 * hp])

    # --- per-child forget gate + segment sum --------------------------------------
    # fx_rep[j] = fx_x[tree_idx[j]] via M^T @ fx (dim-0 contraction, no MT copy)
    fx_rep = lax.dot_general(m_bf, fx_x.astype(bf16),
                             (((0,), (0,)), ((), ())),
                             preferred_element_type=f32)                  # (N, HP)
    f = jax.nn.sigmoid(fh_h + fx_rep)                                     # (N, HP)
    fc = f * c.astype(f32)                                                # (N, HP)
    fc_sum = jnp.dot(m_bf, fc.astype(bf16), preferred_element_type=f32)   # (TP, HP)

    c_new = i_g * u_g + fc_sum
    h_new = o_g * jnp.tanh(c_new)

    # lane-dense output slab: [ h_new | c_new ]
    hc_out_ref[:, 0:hp] = h_new
    hc_out_ref[:, hp:2 * hp] = c_new


def child_sum_tree_attentive_lstm_cell(x, h, c, hx, tree_idx, hidden_idx, params,
                                       num_parents):
    """JAX wrapper. Glue (hx scatter, padding, weight fusion) is plain JAX; the
    whole hot path (2 fused projections + attention + gates + segment sums)
    runs inside one gridded Pallas kernel."""
    N = int(tree_idx.shape[0])          # static (from shape)
    P = int(num_parents)                # static, no device->host sync
    E = int(x.shape[1])
    H = int(params["w_fh"].shape[0])
    K = int(params["w_q"].shape[1])

    KP = _round_up(K, LANE)
    HP = _round_up(H, LANE)
    NP = _round_up(N, LANE)
    TP = LANE if P >= LANE else _round_up(P, 8)
    PP = _round_up(P, TP)
    DX = KP + 4 * HP                    # [q | fx | i | o | u]
    DH = KP + HP                        # [k | fh]

    f32 = jnp.float32
    bf16 = jnp.bfloat16

    # replace_idx_(hx.repeat(N,1), h/c, hidden_idx)  -- glue kept in plain JAX
    h_full = jnp.tile(jnp.reshape(hx[0], (1, H)), (N, 1)).astype(f32)
    c_full = jnp.tile(jnp.reshape(hx[1], (1, H)), (N, 1)).astype(f32)
    if hidden_idx.size > 0:
        h_full = h_full.at[hidden_idx].set(h.astype(f32))
        c_full = c_full.at[hidden_idx].set(c.astype(f32))

    # zero-padded, bf16 kernel inputs (padding contributes nothing: mask columns
    # of padded children are 0 and padded lanes of h/c are 0)
    x_p = jnp.zeros((PP, E), f32).at[:P].set(x.astype(f32)).astype(bf16)
    h_p = jnp.zeros((NP, HP), f32).at[:N, :H].set(h_full).astype(bf16)
    c_p = jnp.zeros((NP, HP), f32).at[:N, :H].set(c_full).astype(bf16)
    tidx_p = jnp.full((1, NP), -1, jnp.int32).at[0, :N].set(tree_idx.astype(jnp.int32))

    # fused, lane-aligned weights (i/o/u chunk order assumed to match checkpoint)
    w_ioux, w_iouh, b_iouh = params["w_ioux"], params["w_iouh"], params["b_iouh"]
    wx = jnp.zeros((E, DX), f32)
    wx = wx.at[:, 0:K].set(params["w_q"])
    wx = wx.at[:, KP:KP + H].set(params["w_fx"])
    wx = wx.at[:, KP + HP:KP + HP + H].set(w_ioux[:, 0:H])
    wx = wx.at[:, KP + 2 * HP:KP + 2 * HP + H].set(w_ioux[:, H:2 * H])
    wx = wx.at[:, KP + 3 * HP:KP + 3 * HP + H].set(w_ioux[:, 2 * H:3 * H])

    bx = jnp.zeros((1, DX), f32)
    bx = bx.at[:, 0:K].set(params["b_q"])
    bx = bx.at[:, KP + HP:KP + HP + H].set(b_iouh[:, 0:H])
    bx = bx.at[:, KP + 2 * HP:KP + 2 * HP + H].set(b_iouh[:, H:2 * H])
    bx = bx.at[:, KP + 3 * HP:KP + 3 * HP + H].set(b_iouh[:, 2 * H:3 * H])

    wh = jnp.zeros((HP, DH), f32)
    wh = wh.at[:H, 0:K].set(params["w_k"])
    wh = wh.at[:H, KP:KP + H].set(params["w_fh"])

    bh = jnp.zeros((1, DH), f32)
    bh = bh.at[:, 0:K].set(params["b_k"])
    bh = bh.at[:, KP:KP + H].set(params["b_fh"])

    wiouh = jnp.zeros((HP, 3 * HP), f32)
    wiouh = wiouh.at[:H, 0:H].set(w_iouh[:, 0:H])
    wiouh = wiouh.at[:H, HP:HP + H].set(w_iouh[:, H:2 * H])
    wiouh = wiouh.at[:H, 2 * HP:2 * HP + H].set(w_iouh[:, 2 * H:3 * H])

    kernel = functools.partial(_tree_attn_lstm_kernel,
                               kp=KP, hp=HP, scale=1.0 / math.sqrt(K))

    full = lambda i: (0, 0)
    hc = pl.pallas_call(
        kernel,
        out_shape=jax.ShapeDtypeStruct((PP, 2 * HP), f32),
        grid_spec=pltpu.PrefetchScalarGridSpec(
            num_scalar_prefetch=0,
            grid=(PP // TP,),
            in_specs=[
                pl.BlockSpec((1, NP), full),               # tree_idx
                pl.BlockSpec((TP, E), lambda i: (i, 0)),   # x tile
                pl.BlockSpec((NP, HP), full),              # h (all children)
                pl.BlockSpec((NP, HP), full),              # c (all children)
                pl.BlockSpec((E, DX), full),               # fused x-weights
                pl.BlockSpec((1, DX), full),               # fused x-biases
                pl.BlockSpec((HP, DH), full),              # fused h-weights
                pl.BlockSpec((1, DH), full),               # fused h-biases
                pl.BlockSpec((HP, 3 * HP), full),          # iouh weights (padded)
            ],
            out_specs=pl.BlockSpec((TP, 2 * HP), lambda i: (i, 0)),
        ),
        compiler_params=pltpu.CompilerParams(
            dimension_semantics=("parallel",),
            vmem_limit_bytes=32 * 1024 * 1024,
        ),
    )(tidx_p, x_p, h_p, c_p,
      wx.astype(bf16), bx, wh.astype(bf16), bh, wiouh.astype(bf16))

    h_new = hc[:P, 0:H]
    c_new = hc[:P, HP:HP + H]
    return h_new, c_new


def _linear_init(key, fan_in, fan_out, bias):
    """PyTorch nn.Linear default init, stored as (in, out) so kernel does x @ W + b."""
    kw, kb = jax.random.split(key)
    bound = 1.0 / math.sqrt(fan_in)
    w = jax.random.uniform(kw, (fan_in, fan_out), jnp.float32, -bound, bound)
    b = (jax.random.uniform(kb, (1, fan_out), jnp.float32, -bound, bound)
         if bias else None)
    return w, b


if __name__ == "__main__":
    E, H, K = 16, 32, 16                     # embedding, hidden, keys sizes

    # tree structure: 8 child slots grouped consecutively into 3 parents
    tree_idx = jnp.array([0, 0, 0, 1, 1, 2, 2, 2], dtype=jnp.int32)   # (N=8,)
    hidden_idx = jnp.array([0, 2, 3, 5, 7], dtype=jnp.int32)          # (5,)
    P = 3                                                             # static

    key = jax.random.PRNGKey(0)
    keys = jax.random.split(key, 12)

    x = jax.random.normal(keys[0], (P, E), jnp.float32)               # per-parent input
    h = jax.random.normal(keys[1], (hidden_idx.shape[0], H), jnp.float32)
    c = jax.random.normal(keys[2], (hidden_idx.shape[0], H), jnp.float32)
    hx = (jax.random.normal(keys[3], (H,), jnp.float32),
          jax.random.normal(keys[4], (H,), jnp.float32))

    # deterministic parameter init (shapes from __init__)
    w_ioux, _ = _linear_init(keys[5], E, 3 * H, bias=False)
    w_iouh, b_iouh = _linear_init(keys[6], H, 3 * H, bias=True)
    w_fx, _ = _linear_init(keys[7], E, H, bias=False)
    w_fh, b_fh = _linear_init(keys[8], H, H, bias=True)
    # SelfAttention(embedding_size, hidden_size, keys_size) params
    w_q, b_q = _linear_init(keys[9], E, K, bias=True)
    w_k, b_k = _linear_init(keys[10], H, K, bias=True)

    params = dict(w_ioux=w_ioux, w_iouh=w_iouh, b_iouh=b_iouh,
                  w_fx=w_fx, w_fh=w_fh, b_fh=b_fh,
                  w_q=w_q, b_q=b_q, w_k=w_k, b_k=b_k)

    h_new, c_new = child_sum_tree_attentive_lstm_cell(
        x, h, c, hx, tree_idx, hidden_idx, params, num_parents=P)
    jax.block_until_ready((h_new, c_new))
    assert h_new.shape == (P, H) and c_new.shape == (P, H)
    assert bool(jnp.all(jnp.isfinite(h_new))) and bool(jnp.all(jnp.isfinite(c_new)))
    print("KERNEL_OK")
</pallas_src>

<mosaic_0001>
module attributes {stable_mosaic.version = 11 : i64} {
  func.func @_tree_attn_lstm_kernel(%arg0: i32, %arg1: memref<1x128xi32, #tpu.memory_space<vmem>>, %arg2: memref<8x16xbf16, #tpu.memory_space<vmem>>, %arg3: memref<128x128xbf16, #tpu.memory_space<vmem>>, %arg4: memref<128x128xbf16, #tpu.memory_space<vmem>>, %arg5: memref<16x640xbf16, #tpu.memory_space<vmem>>, %arg6: memref<1x640xf32, #tpu.memory_space<vmem>>, %arg7: memref<128x256xbf16, #tpu.memory_space<vmem>>, %arg8: memref<1x256xf32, #tpu.memory_space<vmem>>, %arg9: memref<128x384xbf16, #tpu.memory_space<vmem>>, %arg10: memref<8x256xf32, #tpu.memory_space<vmem>>) attributes {dimension_semantics = [#tpu.dimension_semantics<parallel>], iteration_bounds = array<i64: 1>, scalar_prefetch = 0 : i64, scratch_operands = 0 : i64, tpu.core_type = #tpu.core_type<tc>, window_params = [{pipeline_mode = #tpu.pipeline_mode<synchronous>, transform_indices = @transform_0, window_bounds = array<i64: 1, 128>}, {transform_indices = @transform_1, window_bounds = array<i64: 8, 16>}, {pipeline_mode = #tpu.pipeline_mode<synchronous>, transform_indices = @transform_2, window_bounds = array<i64: 128, 128>}, {pipeline_mode = #tpu.pipeline_mode<synchronous>, transform_indices = @transform_3, window_bounds = array<i64: 128, 128>}, {pipeline_mode = #tpu.pipeline_mode<synchronous>, transform_indices = @transform_4, window_bounds = array<i64: 16, 640>}, {pipeline_mode = #tpu.pipeline_mode<synchronous>, transform_indices = @transform_5, window_bounds = array<i64: 1, 640>}, {pipeline_mode = #tpu.pipeline_mode<synchronous>, transform_indices = @transform_6, window_bounds = array<i64: 128, 256>}, {pipeline_mode = #tpu.pipeline_mode<synchronous>, transform_indices = @transform_7, window_bounds = array<i64: 1, 256>}, {pipeline_mode = #tpu.pipeline_mode<synchronous>, transform_indices = @transform_8, window_bounds = array<i64: 128, 384>}, {transform_indices = @transform_9, window_bounds = array<i64: 8, 256>}]} {
    %c0 = arith.constant 0 : index
    %c0_0 = arith.constant 0 : index
    %0 = vector.load %arg2[%c0, %c0_0] : memref<8x16xbf16, #tpu.memory_space<vmem>>, vector<8x16xbf16>
    %c0_1 = arith.constant 0 : index
    %c0_2 = arith.constant 0 : index
    %1 = vector.load %arg3[%c0_1, %c0_2] : memref<128x128xbf16, #tpu.memory_space<vmem>>, vector<128x128xbf16>
    %c0_3 = arith.constant 0 : index
    %c0_4 = arith.constant 0 : index
    %2 = vector.load %arg4[%c0_3, %c0_4] : memref<128x128xbf16, #tpu.memory_space<vmem>>, vector<128x128xbf16>
    %c0_5 = arith.constant 0 : index
    %c0_6 = arith.constant 0 : index
    %3 = vector.load %arg1[%c0_5, %c0_6] : memref<1x128xi32, #tpu.memory_space<vmem>>, vector<1x128xi32>
    %4 = tpu.iota {dimensions = array<i32: 0>} : vector<8x128xi32>
    %c8_i32 = arith.constant 8 : i32
    %5 = arith.muli %arg0, %c8_i32 : i32
    %6 = vector.broadcast %5 : i32 to vector<8x128xi32>
    %7 = arith.addi %4, %6 : vector<8x128xi32>
    %8 = vector.broadcast %3 : vector<1x128xi32> to vector<8x128xi32>
    %9 = arith.cmpi eq, %7, %8 : vector<8x128xi32>
    %10 = arith.extui %9 : vector<8x128xi1> to vector<8x128xi32>
    %11 = arith.sitofp %10 : vector<8x128xi32> to vector<8x128xf32>
    %12 = arith.extui %9 : vector<8x128xi1> to vector<8x128xi32>
    %13 = arith.sitofp %12 : vector<8x128xi32> to vector<8x128xf32>
    %14 = arith.truncf %13 : vector<8x128xf32> to vector<8x128xbf16>
    %c0_7 = arith.constant 0 : index
    %c0_8 = arith.constant 0 : index
    %15 = vector.load %arg5[%c0_7, %c0_8] : memref<16x640xbf16, #tpu.memory_space<vmem>>, vector<16x640xbf16>
    %cst = arith.constant dense<0.000000e+00> : vector<8x640xf32>
    %16 = tpu.matmul %0, %15, %cst {dimension_numbers = #tpu.dot_dimension_numbers<[1], [0], [0], [1], [0, 0, 1, 1], [], []>} : vector<8x16xbf16>, vector<16x640xbf16>, vector<8x640xf32> -> vector<8x640xf32>
    %c0_9 = arith.constant 0 : index
    %c0_10 = arith.constant 0 : index
    %17 = vector.load %arg6[%c0_9, %c0_10] : memref<1x640xf32, #tpu.memory_space<vmem>>, vector<1x640xf32>
    %18 = vector.broadcast %17 : vector<1x640xf32> to vector<8x640xf32>
    %19 = arith.addf %16, %18 : vector<8x640xf32>
    %20 = vector.extract_strided_slice %19 {offsets = [0, 0], sizes = [8, 128], strides = [1, 1]} : vector<8x640xf32> to vector<8x128xf32>
    %21 = vector.extract_strided_slice %19 {offsets = [0, 128], sizes = [8, 128], strides = [1, 1]} : vector<8x640xf32> to vector<8x128xf32>
    %22 = vector.extract_strided_slice %19 {offsets = [0, 256], sizes = [8, 384], strides = [1, 1]} : vector<8x640xf32> to vector<8x384xf32>
    %c0_11 = arith.constant 0 : index
    %c0_12 = arith.constant 0 : index
    %23 = vector.load %arg7[%c0_11, %c0_12] : memref<128x256xbf16, #tpu.memory_space<vmem>>, vector<128x256xbf16>
    %cst_13 = arith.constant dense<0.000000e+00> : vector<128x256xf32>
    %24 = tpu.matmul %1, %23, %cst_13 {dimension_numbers = #tpu.dot_dimension_numbers<[1], [0], [0], [1], [0, 0, 1, 1], [], []>} : vector<128x128xbf16>, vector<128x256xbf16>, vector<128x256xf32> -> vector<128x256xf32>
    %c0_14 = arith.constant 0 : index
    %c0_15 = arith.constant 0 : index
    %25 = vector.load %arg8[%c0_14, %c0_15] : memref<1x256xf32, #tpu.memory_space<vmem>>, vector<1x256xf32>
    %26 = vector.broadcast %25 : vector<1x256xf32> to vector<128x256xf32>
    %27 = arith.addf %24, %26 : vector<128x256xf32>
    %28 = vector.extract_strided_slice %27 {offsets = [0, 0], sizes = [128, 128], strides = [1, 1]} : vector<128x256xf32> to vector<128x128xf32>
    %29 = vector.extract_strided_slice %27 {offsets = [0, 128], sizes = [128, 128], strides = [1, 1]} : vector<128x256xf32> to vector<128x128xf32>
    %30 = arith.truncf %20 : vector<8x128xf32> to vector<8x128xbf16>
    %31 = arith.truncf %28 : vector<128x128xf32> to vector<128x128xbf16>
    %cst_16 = arith.constant dense<0.000000e+00> : vector<8x128xf32>
    %32 = tpu.matmul %30, %31, %cst_16 {dimension_numbers = #tpu.dot_dimension_numbers<[1], [1], [0], [0], [0, 0, 1, 0], [], []>} : vector<8x128xbf16>, vector<128x128xbf16>, vector<8x128xf32> -> vector<8x128xf32>
    %cst_17 = arith.constant 2.500000e-01 : f32
    %33 = vector.broadcast %cst_17 : f32 to vector<8x128xf32>
    %34 = arith.mulf %32, %33 : vector<8x128xf32>
    %cst_18 = arith.constant -1.000000e+30 : f32
    %35 = vector.broadcast %cst_18 : f32 to vector<8x128xf32>
    %36 = arith.select %9, %34, %35 : vector<8x128xi1>, vector<8x128xf32>
    %cst_19 = arith.constant dense<0xFF800000> : vector<8xf32>
    %37 = vector.multi_reduction <maximumf>, %36, %cst_19 [1] : vector<8x128xf32> to vector<8xf32>
    %38 = vector.shape_cast %37 : vector<8xf32> to vector<8x1xf32>
    %39 = vector.broadcast %38 : vector<8x1xf32> to vector<8x128xf32>
    %40 = arith.subf %36, %39 : vector<8x128xf32>
    %41 = math.exp %40 : vector<8x128xf32>
    %42 = arith.mulf %41, %11 : vector<8x128xf32>
    %cst_20 = arith.constant dense<0.000000e+00> : vector<8xf32>
    %43 = vector.multi_reduction <add>, %42, %cst_20 [1] : vector<8x128xf32> to vector<8xf32>
    %44 = vector.shape_cast %43 : vector<8xf32> to vector<8x1xf32>
    %cst_21 = arith.constant 1.000000e-30 : f32
    %45 = vector.broadcast %cst_21 : f32 to vector<8x1xf32>
    %46 = arith.maximumf %44, %45 : vector<8x1xf32>
    %47 = tpu.reciprocal %46 {approx = true} : vector<8x1xf32> -> vector<8x1xf32>
    %48 = vector.broadcast %47 : vector<8x1xf32> to vector<8x128xf32>
    %49 = arith.mulf %42, %48 : vector<8x128xf32>
    %50 = arith.truncf %49 : vector<8x128xf32> to vector<8x128xbf16>
    %cst_22 = arith.constant dense<0.000000e+00> : vector<8x128xf32>
    %51 = tpu.matmul %50, %1, %cst_22 {dimension_numbers = #tpu.dot_dimension_numbers<[1], [0], [0], [1], [0, 0, 1, 1], [], []>} : vector<8x128xbf16>, vector<128x128xbf16>, vector<8x128xf32> -> vector<8x128xf32>
    %52 = arith.truncf %51 : vector<8x128xf32> to vector<8x128xbf16>
    %c0_23 = arith.constant 0 : index
    %c0_24 = arith.constant 0 : index
    %53 = vector.load %arg9[%c0_23, %c0_24] : memref<128x384xbf16, #tpu.memory_space<vmem>>, vector<128x384xbf16>
    %cst_25 = arith.constant dense<0.000000e+00> : vector<8x384xf32>
    %54 = tpu.matmul %52, %53, %cst_25 {dimension_numbers = #tpu.dot_dimension_numbers<[1], [0], [0], [1], [0, 0, 1, 1], [], []>} : vector<8x128xbf16>, vector<128x384xbf16>, vector<8x384xf32> -> vector<8x384xf32>
    %55 = arith.addf %22, %54 : vector<8x384xf32>
    %56 = vector.extract_strided_slice %55 {offsets = [0, 0], sizes = [8, 128], strides = [1, 1]} : vector<8x384xf32> to vector<8x128xf32>
    %57 = arith.negf %56 : vector<8x128xf32>
    %58 = math.exp %57 : vector<8x128xf32>
    %cst_26 = arith.constant 1.000000e+00 : f32
    %59 = vector.broadcast %cst_26 : f32 to vector<8x128xf32>
    %60 = arith.addf %59, %58 : vector<8x128xf32>
    %61 = arith.divf %59, %60 : vector<8x128xf32>
    %62 = vector.extract_strided_slice %55 {offsets = [0, 128], sizes = [8, 128], strides = [1, 1]} : vector<8x384xf32> to vector<8x128xf32>
    %63 = arith.negf %62 : vector<8x128xf32>
    %64 = math.exp %63 : vector<8x128xf32>
    %cst_27 = arith.constant 1.000000e+00 : f32
    %65 = vector.broadcast %cst_27 : f32 to vector<8x128xf32>
    %66 = arith.addf %65, %64 : vector<8x128xf32>
    %67 = arith.divf %65, %66 : vector<8x128xf32>
    %68 = vector.extract_strided_slice %55 {offsets = [0, 256], sizes = [8, 128], strides = [1, 1]} : vector<8x384xf32> to vector<8x128xf32>
    %69 = math.tanh %68 : vector<8x128xf32>
    %70 = arith.truncf %21 : vector<8x128xf32> to vector<8x128xbf16>
    %cst_28 = arith.constant dense<0.000000e+00> : vector<128x128xf32>
    %71 = tpu.matmul %14, %70, %cst_28 {dimension_numbers = #tpu.dot_dimension_numbers<[0], [0], [1], [1], [0, 1, 1, 1], [], []>} : vector<8x128xbf16>, vector<8x128xbf16>, vector<128x128xf32> -> vector<128x128xf32>
    %72 = arith.addf %29, %71 : vector<128x128xf32>
    %73 = arith.negf %72 : vector<128x128xf32>
    %74 = math.exp %73 : vector<128x128xf32>
    %cst_29 = arith.constant 1.000000e+00 : f32
    %75 = vector.broadcast %cst_29 : f32 to vector<128x128xf32>
    %76 = arith.addf %75, %74 : vector<128x128xf32>
    %77 = arith.divf %75, %76 : vector<128x128xf32>
    %78 = arith.extf %2 : vector<128x128xbf16> to vector<128x128xf32>
    %79 = arith.mulf %77, %78 : vector<128x128xf32>
    %80 = arith.truncf %79 : vector<128x128xf32> to vector<128x128xbf16>
    %cst_30 = arith.constant dense<0.000000e+00> : vector<8x128xf32>
    %81 = tpu.matmul %14, %80, %cst_30 {dimension_numbers = #tpu.dot_dimension_numbers<[1], [0], [0], [1], [0, 0, 1, 1], [], []>} : vector<8x128xbf16>, vector<128x128xbf16>, vector<8x128xf32> -> vector<8x128xf32>
    %82 = arith.mulf %61, %69 : vector<8x128xf32>
    %83 = arith.addf %82, %81 : vector<8x128xf32>
    %84 = math.tanh %83 : vector<8x128xf32>
    %85 = arith.mulf %67, %84 : vector<8x128xf32>
    %c0_31 = arith.constant 0 : index
    %c0_32 = arith.constant 0 : index
    %86 = vector.load %arg10[%c0_31, %c0_32] : memref<8x256xf32, #tpu.memory_space<vmem>>, vector<8x128xf32>
    tpu.vector_store %arg10[%c0_31, %c0_32], %85 {strides = array<i32>} : memref<8x256xf32, #tpu.memory_space<vmem>>, vector<8x128xf32>,
    %c0_33 = arith.constant 0 : index
    %c128 = arith.constant 128 : index
    %87 = vector.load %arg10[%c0_33, %c128] : memref<8x256xf32, #tpu.memory_space<vmem>>, vector<8x128xf32>
    tpu.vector_store %arg10[%c0_33, %c128], %83 {strides = array<i32>} : memref<8x256xf32, #tpu.memory_space<vmem>>, vector<8x128xf32>,
    return
  }
  func.func @transform_0(%arg0: i32) -> (i32, i32) {
    %c0_i32 = arith.constant 0 : i32
    %c0_i32_0 = arith.constant 0 : i32
    %c0_i32_1 = arith.constant 0 : i32
    return %c0_i32, %c0_i32_0 : i32, i32
  }
  func.func @transform_1(%arg0: i32) -> (i32, i32) {
    %c0_i32 = arith.constant 0 : i32
    %c0_i32_0 = arith.constant 0 : i32
    return %arg0, %c0_i32 : i32, i32
  }
  func.func @transform_2(%arg0: i32) -> (i32, i32) {
    %c0_i32 = arith.constant 0 : i32
    %c0_i32_0 = arith.constant 0 : i32
    %c0_i32_1 = arith.constant 0 : i32
    return %c0_i32, %c0_i32_0 : i32, i32
  }
  func.func @transform_3(%arg0: i32) -> (i32, i32) {
    %c0_i32 = arith.constant 0 : i32
    %c0_i32_0 = arith.constant 0 : i32
    %c0_i32_1 = arith.constant 0 : i32
    return %c0_i32, %c0_i32_0 : i32, i32
  }
  func.func @transform_4(%arg0: i32) -> (i32, i32) {
    %c0_i32 = arith.constant 0 : i32
    %c0_i32_0 = arith.constant 0 : i32
    %c0_i32_1 = arith.constant 0 : i32
    return %c0_i32, %c0_i32_0 : i32, i32
  }
  func.func @transform_5(%arg0: i32) -> (i32, i32) {
    %c0_i32 = arith.constant 0 : i32
    %c0_i32_0 = arith.constant 0 : i32
    %c0_i32_1 = arith.constant 0 : i32
    return %c0_i32, %c0_i32_0 : i32, i32
  }
  func.func @transform_6(%arg0: i32) -> (i32, i32) {
    %c0_i32 = arith.constant 0 : i32
    %c0_i32_0 = arith.constant 0 : i32
    %c0_i32_1 = arith.constant 0 : i32
    return %c0_i32, %c0_i32_0 : i32, i32
  }
  func.func @transform_7(%arg0: i32) -> (i32, i32) {
    %c0_i32 = arith.constant 0 : i32
    %c0_i32_0 = arith.constant 0 : i32
    %c0_i32_1 = arith.constant 0 : i32
    return %c0_i32, %c0_i32_0 : i32, i32
  }
  func.func @transform_8(%arg0: i32) -> (i32, i32) {
    %c0_i32 = arith.constant 0 : i32
    %c0_i32_0 = arith.constant 0 : i32
    %c0_i32_1 = arith.constant 0 : i32
    return %c0_i32, %c0_i32_0 : i32, i32
  }
  func.func @transform_9(%arg0: i32) -> (i32, i32) {
    %c0_i32 = arith.constant 0 : i32
    %c0_i32_0 = arith.constant 0 : i32
    return %arg0, %c0_i32 : i32, i32
  }
}

</mosaic_0001>

<llo_original>
// kernel: tpu_custom_call.1
$region0: #{tpu_custom_call.1}
  #allocation0 [shape = 'u32[]', space=smem, size = 0x4, offset = 0x4, fixed_abs, tag = 'smem constant byte address 0x4 - core index']
  #allocation1 [shape = 'u32[72,128]{1,0:T(1,128)}', space=vmem, size = 0x9000, scoped, tag = 'internal scratch']
  %s0 = inlined_call_operand.hbm [shape: s32[1,128], index: 0, kind: input, shape index: {}]
  %s1 = inlined_call_operand.hbm [shape: bf16[8,16], index: 1, kind: input, shape index: {}]
  %s2 = inlined_call_operand.hbm [shape: bf16[128,128], index: 2, kind: input, shape index: {}]
  %s3 = inlined_call_operand.hbm [shape: bf16[128,128], index: 3, kind: input, shape index: {}]
  %s4 = inlined_call_operand.hbm [shape: bf16[16,640], index: 4, kind: input, shape index: {}]
  %s5 = inlined_call_operand.hbm [shape: f32[1,640], index: 5, kind: input, shape index: {}]
  %s6 = inlined_call_operand.hbm [shape: bf16[128,256], index: 6, kind: input, shape index: {}]
  %s7 = inlined_call_operand.vmem [shape: f32[1,256], index: 7, kind: input, shape index: {}]
  %s8 = inlined_call_operand.hbm [shape: bf16[128,384], index: 8, kind: input, shape index: {}]
  %s9 = inlined_call_operand.hbm [shape: f32[8,256], index: 9, kind: output, shape index: {}]
  %s10 = sld [smem:[#allocation0]]
  $region78: #{tpu_custom_call.1} parent=0
    _
  %s12 = ssub.s32 1, %s10
  %s13 = scalar_select 0, %s12, %s10
  $region1: #{tpu_custom_call.1} parent=0
    #allocation2 [shape = 'u8[512]{0}', space=vmem, size = 0x400, scoped, tag = 'input window, operand 0, single buffered']
    #allocation3 [shape = 's32[1]{0}', space=sflag, size = 0x4, scoped, tag = 'scoped memory for tpu_custom_call.1']
    #allocation4 [shape = 's32[1]{0}', space=sflag, size = 0x4, scoped, tag = 'scoped memory for tpu_custom_call.1']
    #allocation5 [shape = 'u8[2048]{0}', space=vmem, size = 0x800, scoped, tag = 'input window, operand 1, single buffered']
    #allocation6 [shape = 's32[1]{0}', space=sflag, size = 0x4, scoped, tag = 'scoped memory for tpu_custom_call.1']
    #allocation7 [shape = 'u8[32768]{0}', space=vmem, size = 0x8000, scoped, tag = 'input window, operand 2, single buffered']
    #allocation8 [shape = 'u8[32768]{0}', space=vmem, size = 0x8000, scoped, tag = 'input window, operand 3, single buffered']
    #allocation9 [shape = 's32[1]{0}', space=sflag, size = 0x4, scoped, tag = 'scoped memory for tpu_custom_call.1']
    #allocation10 [shape = 'u8[20480]{0}', space=vmem, size = 0x5000, scoped, tag = 'input window, operand 4, single buffered']
    #allocation11 [shape = 'u8[2560]{0}', space=vmem, size = 0xc00, scoped, tag = 'input window, operand 5, single buffered']
    #allocation12 [shape = 's32[1]{0}', space=sflag, size = 0x4, scoped, tag = 'scoped memory for tpu_custom_call.1']
    #allocation13 [shape = 'u8[65536]{0}', space=vmem, size = 0x10000, scoped, tag = 'input window, operand 6, single buffered']
    #allocation14 [shape = 'u8[98304]{0}', space=vmem, size = 0x18000, scoped, tag = 'input window, operand 8, single buffered']
    #allocation15 [shape = 's32[1]{0}', space=sflag, size = 0x4, scoped, tag = 'scoped memory for tpu_custom_call.1']
    #allocation16 [shape = 'u8[8192]{0}', space=vmem, size = 0x2000, scoped, tag = 'output window, operand 0, single buffered']
    %14 = vsyncpa [#allocation3], 0
    %15 = vsyncpa [#allocation6], 0
    %16 = vsyncpa [#allocation9], 0
    %17 = vsyncpa [#allocation12], 0
    %18 = vsyncpa [#allocation15], 0
    %19 = vsyncpa [#allocation4], 0
    // Predicated region
    $region2: #{tpu_custom_call.1} parent=1 // pred_check
      _
    $region3: #{tpu_custom_call.1} parent=1 // pred_check_branch
      %21 = sbr.rel (0) target = $region5
    $region4: #{tpu_custom_call.1} parent=1 // pred_region
      %23 = vsyncadd [#allocation3], 0
      %s25 = sshll.u32 %s0, 4
      %s26 = int_to_ptr.hbm [resolvable:$true] %s25
      %s27 = sshll.u32 [#allocation2], 4
      %s28 = int_to_ptr.vmem [resolvable:$true] %s27
      %30 = dma.hbm_to_vmem [thread:$0]  %s26, 16, %s28, [#allocation3]
    $region5: #{tpu_custom_call.1} parent=1 // pred_fallthru
      _
    // Predicated region
    $region6: #{tpu_custom_call.1} parent=1 // pred_check
      _
    $region7: #{tpu_custom_call.1} parent=1 // pred_check_branch
      %32 = sbr.rel (0) target = $region9
    $region8: #{tpu_custom_call.1} parent=1 // pred_region
      %34 = vsyncadd [#allocation6], 0
      %s36 = sshll.u32 %s1, 4
      %s37 = int_to_ptr.hbm [resolvable:$true] %s36
      %s38 = sshll.u32 [#allocation5], 4
      %s39 = int_to_ptr.vmem [resolvable:$true] %s38
      %41 = dma.hbm_to_vmem [thread:$0]  %s37, 64, %s39, [#allocation6]
    $region9: #{tpu_custom_call.1} parent=1 // pred_fallthru
      _
    // Predicated region
    $region10: #{tpu_custom_call.1} parent=1 // pred_check
      _
    $region11: #{tpu_custom_call.1} parent=1 // pred_check_branch
      %43 = sbr.rel (0) target = $region13
    $region12: #{tpu_custom_call.1} parent=1 // pred_region
      %45 = vsyncadd [#allocation6], 0
      %s46 = sshll.u32 %s2, 4
      %s47 = int_to_ptr.hbm [resolvable:$true] %s46
      %s48 = sshll.u32 [#allocation7], 4
      %s49 = int_to_ptr.vmem [resolvable:$true] %s48
      %54 = dma.hbm_to_vmem [thread:$0]  %s47, 1024, %s49, [#allocation6], 64, 64, 4
    $region13: #{tpu_custom_call.1} parent=1 // pred_fallthru
      _
    // Predicated region
    $region14: #{tpu_custom_call.1} parent=1 // pred_check
      _
    $region15: #{tpu_custom_call.1} parent=1 // pred_check_branch
      %56 = sbr.rel (0) target = $region17
    $region16: #{tpu_custom_call.1} parent=1 // pred_region
      %58 = vsyncadd [#allocation9], 0
      %s59 = sshll.u32 %s3, 4
      %s60 = int_to_ptr.hbm [resolvable:$true] %s59
      %s61 = sshll.u32 [#allocation8], 4
      %s62 = int_to_ptr.vmem [resolvable:$true] %s61
      %67 = dma.hbm_to_vmem [thread:$0]  %s60, 1024, %s62, [#allocation9], 64, 64, 4
    $region17: #{tpu_custom_call.1} parent=1 // pred_fallthru
      _
    // Predicated region
    $region18: #{tpu_custom_call.1} parent=1 // pred_check
      _
    $region19: #{tpu_custom_call.1} parent=1 // pred_check_branch
      %69 = sbr.rel (0) target = $region21
    $region20: #{tpu_custom_call.1} parent=1 // pred_region
      %71 = vsyncadd [#allocation9], 0
      %s72 = sshll.u32 %s4, 4
      %s73 = int_to_ptr.hbm [resolvable:$true] %s72
      %s74 = sshll.u32 [#allocation10], 4
      %s75 = int_to_ptr.vmem [resolvable:$true] %s74
      %80 = dma.hbm_to_vmem [thread:$0]  %s73, 640, %s75, [#allocation9], 320, 320, 20
    $region21: #{tpu_custom_call.1} parent=1 // pred_fallthru
      _
    // Predicated region
    $region22: #{tpu_custom_call.1} parent=1 // pred_check
      _
    $region23: #{tpu_custom_call.1} parent=1 // pred_check_branch
      %82 = sbr.rel (0) target = $region25
    $region24: #{tpu_custom_call.1} parent=1 // pred_region
      %84 = vsyncadd [#allocation12], 0
      %s86 = sshll.u32 %s5, 4
      %s87 = int_to_ptr.hbm [resolvable:$true] %s86
      %s88 = sshll.u32 [#allocation11], 4
      %s89 = int_to_ptr.vmem [resolvable:$true] %s88
      %91 = dma.hbm_to_vmem [thread:$0]  %s87, 80, %s89, [#allocation12]
    $region25: #{tpu_custom_call.1} parent=1 // pred_fallthru
      _
    // Predicated region
    $region26: #{tpu_custom_call.1} parent=1 // pred_check
      _
    $region27: #{tpu_custom_call.1} parent=1 // pred_check_branch
      %93 = sbr.rel (0) target = $region29
    $region28: #{tpu_custom_call.1} parent=1 // pred_region
      %95 = vsyncadd [#allocation12], 0
      %s96 = sshll.u32 %s6, 4
      %s97 = int_to_ptr.hbm [resolvable:$true] %s96
      %s98 = sshll.u32 [#allocation13], 4
      %s99 = int_to_ptr.vmem [resolvable:$true] %s98
      %104 = dma.hbm_to_vmem [thread:$0]  %s97, 2048, %s99, [#allocation12], 128, 128, 8
    $region29: #{tpu_custom_call.1} parent=1 // pred_fallthru
      _
    // Predicated region
    $region30: #{tpu_custom_call.1} parent=1 // pred_check
      _
    $region31: #{tpu_custom_call.1} parent=1 // pred_check_branch
      %106 = sbr.rel (0) target = $region33
    $region32: #{tpu_custom_call.1} parent=1 // pred_region
      _
    $region33: #{tpu_custom_call.1} parent=1 // pred_fallthru
      _
    // Predicated region
    $region34: #{tpu_custom_call.1} parent=1 // pred_check
      _
    $region35: #{tpu_custom_call.1} parent=1 // pred_check_branch
      %108 = sbr.rel (0) target = $region37
    $region36: #{tpu_custom_call.1} parent=1 // pred_region
      %110 = vsyncadd [#allocation15], 0
      %s111 = sshll.u32 %s8, 4
      %s112 = int_to_ptr.hbm [resolvable:$true] %s111
      %s113 = sshll.u32 [#allocation14], 4
      %s114 = int_to_ptr.vmem [resolvable:$true] %s113
      %119 = dma.hbm_to_vmem [thread:$0]  %s112, 3072, %s114, [#allocation15], 192, 192, 12
    $region37: #{tpu_custom_call.1} parent=1 // pred_fallthru
      _
    // Predicated region
    $region38: #{tpu_custom_call.1} parent=1 // pred_check
      _
    $region39: #{tpu_custom_call.1} parent=1 // pred_check_branch
      %121 = sbr.rel (0) target = $region41
    $region40: #{tpu_custom_call.1} parent=1 // pred_region
      %123 = dma.done [#allocation3], 16
    $region41: #{tpu_custom_call.1} parent=1 // pred_fallthru
      _
    // Predicated region
    $region42: #{tpu_custom_call.1} parent=1 // pred_check
      _
    $region43: #{tpu_custom_call.1} parent=1 // pred_check_branch
      %125 = sbr.rel (0) target = $region45
    $region44: #{tpu_custom_call.1} parent=1 // pred_region
      %127 = dma.done [#allocation6], 64
    $region45: #{tpu_custom_call.1} parent=1 // pred_fallthru
      _
    // Predicated region
    $region46: #{tpu_custom_call.1} parent=1 // pred_check
      _
    $region47: #{tpu_custom_call.1} parent=1 // pred_check_branch
      %129 = sbr.rel (0) target = $region49
    $region48: #{tpu_custom_call.1} parent=1 // pred_region
      %131 = dma.done [#allocation6], 1024
    $region49: #{tpu_custom_call.1} parent=1 // pred_fallthru
      _
    // Predicated region
    $region50: #{tpu_custom_call.1} parent=1 // pred_check
      _
    $region51: #{tpu_custom_call.1} parent=1 // pred_check_branch
      %133 = sbr.rel (0) target = $region53
    $region52: #{tpu_custom_call.1} parent=1 // pred_region
      %135 = dma.done [#allocation9], 1024
    $region53: #{tpu_custom_call.1} parent=1 // pred_fallthru
      _
    // Predicated region
    $region54: #{tpu_custom_call.1} parent=1 // pred_check
      _
    $region55: #{tpu_custom_call.1} parent=1 // pred_check_branch
      %137 = sbr.rel (0) target = $region57
    $region56: #{tpu_custom_call.1} parent=1 // pred_region
      %139 = dma.done [#allocation9], 640
    $region57: #{tpu_custom_call.1} parent=1 // pred_fallthru
      _
    // Predicated region
    $region58: #{tpu_custom_call.1} parent=1 // pred_check
      _
    $region59: #{tpu_custom_call.1} parent=1 // pred_check_branch
      %141 = sbr.rel (0) target = $region61
    $region60: #{tpu_custom_call.1} parent=1 // pred_region
      %143 = dma.done [#allocation12], 80
    $region61: #{tpu_custom_call.1} parent=1 // pred_fallthru
      _
    // Predicated region
    $region62: #{tpu_custom_call.1} parent=1 // pred_check
      _
    $region63: #{tpu_custom_call.1} parent=1 // pred_check_branch
      %145 = sbr.rel (0) target = $region65
    $region64: #{tpu_custom_call.1} parent=1 // pred_region
      %147 = dma.done [#allocation12], 2048
    $region65: #{tpu_custom_call.1} parent=1 // pred_fallthru
      _
    // Predicated region
    $region66: #{tpu_custom_call.1} parent=1 // pred_check
      _
    $region67: #{tpu_custom_call.1} parent=1 // pred_check_branch
      %149 = sbr.rel (0) target = $region69
    $region68: #{tpu_custom_call.1} parent=1 // pred_region
      %151 = dma.done [#allocation15], 3072
    $region69: #{tpu_custom_call.1} parent=1 // pred_fallthru
      _
    %v153 = vld [vmem:[#allocation5] sm:$0xf]
    %v154 = vld [vmem:[#allocation7] sm:$0xf]
    %v155 = vld [vmem:[#allocation7 + $0x4] sm:$0xf]
    %v156 = vld [vmem:[#allocation7 + $0x8] sm:$0xf]
    %v157 = vld [vmem:[#allocation7 + $0xc] sm:$0xf]
    %v158 = vld [vmem:[#allocation7 + $0x10] sm:$0xf]
    %v159 = vld [vmem:[#allocation7 + $0x14] sm:$0xf]
    %v160 = vld [vmem:[#allocation7 + $0x18] sm:$0xf]
    %v161 = vld [vmem:[#allocation7 + $0x1c] sm:$0xf]
    %v162 = vld [vmem:[#allocation7 + $0x20] sm:$0xf]
    %v163 = vld [vmem:[#allocation7 + $0x24] sm:$0xf]
    %v164 = vld [vmem:[#allocation7 + $0x28] sm:$0xf]
    %v165 = vld [vmem:[#allocation7 + $0x2c] sm:$0xf]
    %v166 = vld [vmem:[#allocation7 + $0x30] sm:$0xf]
    %v167 = vld [vmem:[#allocation7 + $0x34] sm:$0xf]
    %v168 = vld [vmem:[#allocation7 + $0x38] sm:$0xf]
    %v169 = vld [vmem:[#allocation7 + $0x3c] sm:$0xf]
    %v170 = vld [vmem:[#allocation8] sm:$0xf]
    %v171 = vld [vmem:[#allocation8 + $0x4] sm:$0xf]
    %v172 = vld [vmem:[#allocation8 + $0x8] sm:$0xf]
    %v173 = vld [vmem:[#allocation8 + $0xc] sm:$0xf]
    %v174 = vld [vmem:[#allocation8 + $0x10] sm:$0xf]
    %v175 = vld [vmem:[#allocation8 + $0x14] sm:$0xf]
    %v176 = vld [vmem:[#allocation8 + $0x18] sm:$0xf]
    %v177 = vld [vmem:[#allocation8 + $0x1c] sm:$0xf]
    %v178 = vld [vmem:[#allocation8 + $0x20] sm:$0xf]
    %v179 = vld [vmem:[#allocation8 + $0x24] sm:$0xf]
    %v180 = vld [vmem:[#allocation8 + $0x28] sm:$0xf]
    %v181 = vld [vmem:[#allocation8 + $0x2c] sm:$0xf]
    %v182 = vld [vmem:[#allocation8 + $0x30] sm:$0xf]
    %v183 = vld [vmem:[#allocation8 + $0x34] sm:$0xf]
    %v184 = vld [vmem:[#allocation8 + $0x38] sm:$0xf]
    %v185 = vld [vmem:[#allocation8 + $0x3c] sm:$0xf]
    %v186 = vld [vmem:[#allocation2] sm:$0x1]
    %v187 = vlaneseq
    %v188 = vshrl.u32 %v187, 7
    %s189 = smul.u32 0, 8
    %v190 = vstv %s189
    %v191 = vadd.s32 %v188, %v190
    %v192 = vperm.slane %v186, 0
    %vm193 = vcmp.eq.s32.totalorder %v191, %v192
    %v194 = vsel %vm193, 1, 0
    %v195 = vcvt.s32.f32 %v194
    %v196 = vpack.c.bf16 %v195, %v195
    %v197 = vld [vmem:[#allocation10] sm:$0xff]
    %v198 = vld [vmem:[#allocation10 + $0x8] sm:$0xff]
    %v199 = vld [vmem:[#allocation10 + $0x10] sm:$0xf]
    %v200 = vld [vmem:[#allocation10 + $0x14] sm:$0xff]
    %v201 = vld [vmem:[#allocation10 + $0x1c] sm:$0xff]
    %v202 = vld [vmem:[#allocation10 + $0x24] sm:$0xf]
    %v203 = vld [vmem:[#allocation11] sm:$0x1f]
    %v205 = vperm.slane %v203, 0
    %v206 = vperm.slane %v203, 1
    %v207 = vperm.slane %v203, 2
    %v208 = vperm.slane %v203, 3
    %v209 = vperm.slane %v203, 4
    %v221 = vunpack.c.l.b16 %v197
    %v222 = vunpack.c.h.b16 %v197
    %v223 = vunpack.c.l.b16 %v198
    %v224 = vunpack.c.h.b16 %v198
    %v225 = vunpack.c.l.b16 %v199
    %v226 = vunpack.c.l.b16 %v200
    %v227 = vunpack.c.h.b16 %v200
    %v228 = vunpack.c.l.b16 %v201
    %v229 = vunpack.c.h.b16 %v201
    %v230 = vunpack.c.l.b16 %v202
    %v231 = vpack.c.b16 %v226, %v221
    %v232 = vpack.c.b16 %v227, %v222
    %v233 = vpack.c.b16 %v228, %v223
    %v234 = vpack.c.b16 %v229, %v224
    %v235 = vpack.c.b16 %v230, %v225
    %vm241 = vcmask 130048
    %v243 = vsel %vm241, %v153, 0
    %245 = vmatpush.bf16.msra.mxu0 0
    %246 = vmatpush.bf16.msra.mxu0 0
    %247 = vmatpush.bf16.msra.mxu0 0
    %248 = vmatpush.bf16.msra.mxu0 0
    %249 = vmatpush.bf16.msra.mxu0 0
    %250 = vmatpush.bf16.msra.mxu0 0
    %251 = vmatpush.bf16.msra.mxu0 0
    %252 = vmatpush.bf16.msra.mxu0 %v231
    %253 = vmatmul.bf16.gmra.mxu0 %v243
    %v254 = vpop.f32.mrf.mxu0
    %v255 = vadd.f32 %v205, %v254
    %v256 = vpop.f32.mrf.mxu0
    %257 = vdwg.mxu0
    %258 = vmatpush.bf16.msra.mxu0 0
    %259 = vmatpush.bf16.msra.mxu0 0
    %260 = vmatpush.bf16.msra.mxu0 0
    %261 = vmatpush.bf16.msra.mxu0 0
    %262 = vmatpush.bf16.msra.mxu0 0
    %263 = vmatpush.bf16.msra.mxu0 0
    %264 = vmatpush.bf16.msra.mxu0 0
    %265 = vmatpush.bf16.msra.mxu0 %v232
    %266 = vmatmul.bf16.gmra.mxu0 %v243
    %v267 = vpop.f32.mrf.mxu0
    %v268 = vadd.f32 %v206, %v267
    %v269 = vpop.f32.mrf.mxu0
    %270 = vdwg.mxu0
    %271 = vmatpush.bf16.msra.mxu0 0
    %272 = vmatpush.bf16.msra.mxu0 0
    %273 = vmatpush.bf16.msra.mxu0 0
    %274 = vmatpush.bf16.msra.mxu0 0
    %275 = vmatpush.bf16.msra.mxu0 0
    %276 = vmatpush.bf16.msra.mxu0 0
    %277 = vmatpush.bf16.msra.mxu0 0
    %278 = vmatpush.bf16.msra.mxu0 %v233
    %279 = vmatmul.bf16.gmra.mxu0 %v243
    %v280 = vpop.f32.mrf.mxu0
    %v281 = vadd.f32 %v207, %v280
    %v282 = vpop.f32.mrf.mxu0
    %283 = vdwg.mxu0
    %284 = vmatpush.bf16.msra.mxu0 0
    %285 = vmatpush.bf16.msra.mxu0 0
    %286 = vmatpush.bf16.msra.mxu0 0
    %287 = vmatpush.bf16.msra.mxu0 0
    %288 = vmatpush.bf16.msra.mxu0 0
    %289 = vmatpush.bf16.msra.mxu0 0
    %290 = vmatpush.bf16.msra.mxu0 0
    %291 = vmatpush.bf16.msra.mxu0 %v234
    %292 = vmatmul.bf16.gmra.mxu0 %v243
    %v293 = vpop.f32.mrf.mxu0
    %v294 = vadd.f32 %v208, %v293
    %v295 = vpop.f32.mrf.mxu0
    %296 = vdwg.mxu0
    %297 = vmatpush.bf16.msra.mxu0 0
    %298 = vmatpush.bf16.msra.mxu0 0
    %299 = vmatpush.bf16.msra.mxu0 0
    %300 = vmatpush.bf16.msra.mxu0 0
    %301 = vmatpush.bf16.msra.mxu0 0
    %302 = vmatpush.bf16.msra.mxu0 0
    %303 = vmatpush.bf16.msra.mxu0 0
    %304 = vmatpush.bf16.msra.mxu0 %v235
    %305 = vmatmul.bf16.gmra.mxu0 %v243
    %v306 = vpop.f32.mrf.mxu0
    %v307 = vadd.f32 %v209, %v306
    %v308 = vpop.f32.mrf.mxu0
    %309 = vdwg.mxu0
    %v310 = vld [vmem:[#allocation13] sm:$0xff]
    %v311 = vld [vmem:[#allocation13 + $0x8] sm:$0xff]
    %v312 = vld [vmem:[#allocation13 + $0x10] sm:$0xff]
    %v313 = vld [vmem:[#allocation13 + $0x18] sm:$0xff]
    %v314 = vld [vmem:[#allocation13 + $0x20] sm:$0xff]
    %v315 = vld [vmem:[#allocation13 + $0x28] sm:$0xff]
    %v316 = vld [vmem:[#allocation13 + $0x30] sm:$0xff]
    %v317 = vld [vmem:[#allocation13 + $0x38] sm:$0xff]
    %v318 = vld [vmem:[#allocation13 + $0x40] sm:$0xff]
    %v319 = vld [vmem:[#allocation13 + $0x48] sm:$0xff]
    %v320 = vld [vmem:[#allocation13 + $0x50] sm:$0xff]
    %v321 = vld [vmem:[#allocation13 + $0x58] sm:$0xff]
    %v322 = vld [vmem:[#allocation13 + $0x60] sm:$0xff]
    %v323 = vld [vmem:[#allocation13 + $0x68] sm:$0xff]
    %v324 = vld [vmem:[#allocation13 + $0x70] sm:$0xff]
    %v325 = vld [vmem:[#allocation13 + $0x78] sm:$0xff]
    %v326 = vld [vmem:[%s7] sm:$0x3]
    %v328 = vperm.slane %v326, 0
    %v329 = vperm.slane %v326, 1
    %v348 = vunpack.c.l.b16 %v154
    %v349 = vunpack.c.l.b16 %v155
    %v350 = vunpack.c.l.b16 %v156
    %v351 = vunpack.c.l.b16 %v157
    %v352 = vunpack.c.l.b16 %v158
    %v353 = vunpack.c.l.b16 %v159
    %v354 = vunpack.c.l.b16 %v160
    %v355 = vunpack.c.l.b16 %v161
    %v356 = vunpack.c.l.b16 %v162
    %v357 = vunpack.c.l.b16 %v163
    %v358 = vunpack.c.l.b16 %v164
    %v359 = vunpack.c.l.b16 %v165
    %v360 = vunpack.c.l.b16 %v166
    %v361 = vunpack.c.l.b16 %v167
    %v362 = vunpack.c.l.b16 %v168
    %v363 = vunpack.c.l.b16 %v169
    %v364 = vpack.c.b16 %v349, %v348
    %v365 = vpack.c.b16 %v351, %v350
    %v366 = vpack.c.b16 %v353, %v352
    %v367 = vpack.c.b16 %v355, %v354
    %v368 = vpack.c.b16 %v357, %v356
    %v369 = vpack.c.b16 %v359, %v358
    %v370 = vpack.c.b16 %v361, %v360
    %v371 = vpack.c.b16 %v363, %v362
    %v396 = vunpack.c.l.b16 %v310
    %v397 = vunpack.c.h.b16 %v310
    %v398 = vunpack.c.l.b16 %v311
    %v399 = vunpack.c.h.b16 %v311
    %v400 = vunpack.c.l.b16 %v312
    %v401 = vunpack.c.h.b16 %v312
    %v402 = vunpack.c.l.b16 %v313
    %v403 = vunpack.c.h.b16 %v313
    %v404 = vunpack.c.l.b16 %v314
    %v405 = vunpack.c.h.b16 %v314
    %v406 = vunpack.c.l.b16 %v315
    %v407 = vunpack.c.h.b16 %v315
    %v408 = vunpack.c.l.b16 %v316
    %v409 = vunpack.c.h.b16 %v316
    %v410 = vunpack.c.l.b16 %v317
    %v411 = vunpack.c.h.b16 %v317
    %v412 = vunpack.c.l.b16 %v318
    %v413 = vunpack.c.h.b16 %v318
    %v414 = vunpack.c.l.b16 %v319
    %v415 = vunpack.c.h.b16 %v319
    %v416 = vunpack.c.l.b16 %v320
    %v417 = vunpack.c.h.b16 %v320
    %v418 = vunpack.c.l.b16 %v321
    %v419 = vunpack.c.h.b16 %v321
    %v420 = vunpack.c.l.b16 %v322
    %v421 = vunpack.c.h.b16 %v322
    %v422 = vunpack.c.l.b16 %v323
    %v423 = vunpack.c.h.b16 %v323
    %v424 = vunpack.c.l.b16 %v324
    %v425 = vunpack.c.h.b16 %v324
    %v426 = vunpack.c.l.b16 %v325
    %v427 = vunpack.c.h.b16 %v325
    %v428 = vpack.c.b16 %v398, %v396
    %v429 = vpack.c.b16 %v399, %v397
    %v430 = vpack.c.b16 %v402, %v400
    %v431 = vpack.c.b16 %v403, %v401
    %v432 = vpack.c.b16 %v406, %v404
    %v433 = vpack.c.b16 %v407, %v405
    %v434 = vpack.c.b16 %v410, %v408
    %v435 = vpack.c.b16 %v411, %v409
    %v436 = vpack.c.b16 %v414, %v412
    %v437 = vpack.c.b16 %v415, %v413
    %v438 = vpack.c.b16 %v418, %v416
    %v439 = vpack.c.b16 %v419, %v417
    %v440 = vpack.c.b16 %v422, %v420
    %v441 = vpack.c.b16 %v423, %v421
    %v442 = vpack.c.b16 %v426, %v424
    %v443 = vpack.c.b16 %v427, %v425
    %460 = vmatpush.bf16.msra.mxu0 %v442
    %461 = vmatpush.bf16.msra.mxu0 %v440
    %462 = vmatpush.bf16.msra.mxu0 %v438
    %463 = vmatpush.bf16.msra.mxu0 %v436
    %464 = vmatpush.bf16.msra.mxu0 %v434
    %465 = vmatpush.bf16.msra.mxu0 %v432
    %466 = vmatpush.bf16.msra.mxu0 %v430
    %467 = vmatpush.bf16.msra.mxu0 %v428
    %468 = vmatmul.bf16.gmra.mxu0 %v364
    %v469 = vpop.f32.mrf.mxu0
    %v470 = vadd.f32 %v328, %v469
    %v471 = vpop.f32.mrf.mxu0
    %v472 = vadd.f32 %v328, %v471
    %473 = vmatmul.bf16.gmra.mxu0 %v365
    %v474 = vpop.f32.mrf.mxu0
    %v475 = vadd.f32 %v328, %v474
    %v476 = vpop.f32.mrf.mxu0
    %v477 = vadd.f32 %v328, %v476
    %478 = vmatmul.bf16.gmra.mxu0 %v366
    %v479 = vpop.f32.mrf.mxu0
    %v480 = vadd.f32 %v328, %v479
    %v481 = vpop.f32.mrf.mxu0
    %v482 = vadd.f32 %v328, %v481
    %483 = vmatmul.bf16.gmra.mxu0 %v367
    %v484 = vpop.f32.mrf.mxu0
    %v485 = vadd.f32 %v328, %v484
    %v486 = vpop.f32.mrf.mxu0
    %v487 = vadd.f32 %v328, %v486
    %488 = vmatmul.bf16.gmra.mxu0 %v368
    %v489 = vpop.f32.mrf.mxu0
    %v490 = vadd.f32 %v328, %v489
    %v491 = vpop.f32.mrf.mxu0
    %v492 = vadd.f32 %v328, %v491
    %493 = vmatmul.bf16.gmra.mxu0 %v369
    %v494 = vpop.f32.mrf.mxu0
    %v495 = vadd.f32 %v328, %v494
    %v496 = vpop.f32.mrf.mxu0
    %v497 = vadd.f32 %v328, %v496
    %498 = vmatmul.bf16.gmra.mxu0 %v370
    %v499 = vpop.f32.mrf.mxu0
    %v500 = vadd.f32 %v328, %v499
    %v501 = vpop.f32.mrf.mxu0
    %v502 = vadd.f32 %v328, %v501
    %503 = vmatmul.bf16.gmra.mxu0 %v371
    %v504 = vpop.f32.mrf.mxu0
    %v505 = vadd.f32 %v328, %v504
    %v506 = vpop.f32.mrf.mxu0
    %v507 = vadd.f32 %v328, %v506
    %508 = vdwg.mxu0
    %509 = vmatpush.bf16.msra.mxu0 %v443
    %510 = vmatpush.bf16.msra.mxu0 %v441
    %511 = vmatpush.bf16.msra.mxu0 %v439
    %512 = vmatpush.bf16.msra.mxu0 %v437
    %513 = vmatpush.bf16.msra.mxu0 %v435
    %514 = vmatpush.bf16.msra.mxu0 %v433
    %515 = vmatpush.bf16.msra.mxu0 %v431
    %516 = vmatpush.bf16.msra.mxu0 %v429
    %517 = vmatmul.bf16.gmra.mxu0 %v364
    %v518 = vpop.f32.mrf.mxu0
    %v519 = vadd.f32 %v329, %v518
    %v520 = vpop.f32.mrf.mxu0
    %v521 = vadd.f32 %v329, %v520
    %522 = vmatmul.bf16.gmra.mxu0 %v365
    %v523 = vpop.f32.mrf.mxu0
    %v524 = vadd.f32 %v329, %v523
    %v525 = vpop.f32.mrf.mxu0
    %v526 = vadd.f32 %v329, %v525
    %527 = vmatmul.bf16.gmra.mxu0 %v366
    %v528 = vpop.f32.mrf.mxu0
    %v529 = vadd.f32 %v329, %v528
    %v530 = vpop.f32.mrf.mxu0
    %v531 = vadd.f32 %v329, %v530
    %532 = vmatmul.bf16.gmra.mxu0 %v367
    %v533 = vpop.f32.mrf.mxu0
    %v534 = vadd.f32 %v329, %v533
    %v535 = vpop.f32.mrf.mxu0
    %v536 = vadd.f32 %v329, %v535
    %537 = vmatmul.bf16.gmra.mxu0 %v368
    %v538 = vpop.f32.mrf.mxu0
    %v539 = vadd.f32 %v329, %v538
    %v540 = vpop.f32.mrf.mxu0
    %v541 = vadd.f32 %v329, %v540
    %542 = vmatmul.bf16.gmra.mxu0 %v369
    %v543 = vpop.f32.mrf.mxu0
    %v544 = vadd.f32 %v329, %v543
    %v545 = vpop.f32.mrf.mxu0
    %v546 = vadd.f32 %v329, %v545
    %547 = vmatmul.bf16.gmra.mxu0 %v370
    %v548 = vpop.f32.mrf.mxu0
    %v549 = vadd.f32 %v329, %v548
    %v550 = vpop.f32.mrf.mxu0
    %v551 = vadd.f32 %v329, %v550
    %552 = vmatmul.bf16.gmra.mxu0 %v371
    %v553 = vpop.f32.mrf.mxu0
    %v554 = vadd.f32 %v329, %v553
    %v555 = vpop.f32.mrf.mxu0
    %v556 = vadd.f32 %v329, %v555
    %557 = vdwg.mxu0
    %v558 = vpack.c.bf16 %v255, %v255
    %v559 = vpack.c.bf16 %v472, %v470
    %v560 = vpack.c.bf16 %v477, %v475
    %v561 = vpack.c.bf16 %v482, %v480
    %v562 = vpack.c.bf16 %v487, %v485
    %v563 = vpack.c.bf16 %v492, %v490
    %v564 = vpack.c.bf16 %v497, %v495
    %v565 = vpack.c.bf16 %v502, %v500
    %v566 = vpack.c.bf16 %v507, %v505
    %567 = vmatpush.bf16.xpose.msra.mxu0 %v566
    %568 = vmatpush.bf16.xpose.msra.mxu0 %v565
    %569 = vmatpush.bf16.xpose.msra.mxu0 %v564
    %570 = vmatpush.bf16.xpose.msra.mxu0 %v563
    %571 = vmatpush.bf16.xpose.msra.mxu0 %v562
    %572 = vmatpush.bf16.xpose.msra.mxu0 %v561
    %573 = vmatpush.bf16.xpose.msra.mxu0 %v560
    %574 = vmatpush.bf16.xpose.msra.mxu0 %v559
    %575 = vmatmul.bf16.gmra.mxu0 %v558
    %v576 = vpop.f32.mrf.mxu0
    %v577 = vadd.f32 0.0, %v576
    %v578 = vpop.f32.mrf.mxu0
    %579 = vdwg.mxu0
    %v580 = vmul.f32 %v577, 0.25
    %v581 = vsel %vm193, %v580, -1e+30
    %582 = vmax.xlane.f32.xlu0 %v581
    %v583 = vpop.xlane.xlu0 %582
    %v584 = vsub.f32 %v581, %v583
    %v585 = vmul.f32 %v584, 1.442695
    %v586 = vpow.pop %v585
    %v587 = vmul.f32 %v586, %v195
    %588 = vadd.xlane.f32.xlu0 %v587
    %v589 = vpop.xlane.xlu0 %588
    %v590 = vmax.f32 %v589, 1e-30
    %v591 = vrcp.pop %v590
    %v592 = vmul.f32 %v587, %v591
    %v593 = vpack.c.bf16 %v592, %v592
    %594 = vmatpush.bf16.msra.mxu0 %v371
    %595 = vmatpush.bf16.msra.mxu0 %v370
    %596 = vmatpush.bf16.msra.mxu0 %v369
    %597 = vmatpush.bf16.msra.mxu0 %v368
    %598 = vmatpush.bf16.msra.mxu0 %v367
    %599 = vmatpush.bf16.msra.mxu0 %v366
    %600 = vmatpush.bf16.msra.mxu0 %v365
    %601 = vmatpush.bf16.msra.mxu0 %v364
    %602 = vmatmul.bf16.gmra.mxu0 %v593
    %v603 = vpop.f32.mrf.mxu0
    %v604 = vadd.f32 0.0, %v603
    %v605 = vpop.f32.mrf.mxu0
    %606 = vdwg.mxu0
    %v607 = vpack.c.bf16 %v604, %v604
    %v608 = vld [vmem:[#allocation14] sm:$0xff]
    %v609 = vld [vmem:[#allocation14 + $0x8] sm:$0xf]
    %v610 = vld [vmem:[#allocation14 + $0xc] sm:$0xff]
    %v611 = vld [vmem:[#allocation14 + $0x14] sm:$0xf]
    %v612 = vld [vmem:[#allocation14 + $0x18] sm:$0xff]
    %v613 = vld [vmem:[#allocation14 + $0x20] sm:$0xf]
    %v614 = vld [vmem:[#allocation14 + $0x24] sm:$0xff]
    %v615 = vld [vmem:[#allocation14 + $0x2c] sm:$0xf]
    %v616 = vld [vmem:[#allocation14 + $0x30] sm:$0xff]
    %v617 = vld [vmem:[#allocation14 + $0x38] sm:$0xf]
    %v618 = vld [vmem:[#allocation14 + $0x3c] sm:$0xff]
    %v619 = vld [vmem:[#allocation14 + $0x44] sm:$0xf]
    %v620 = vld [vmem:[#allocation14 + $0x48] sm:$0xff]
    %v621 = vld [vmem:[#allocation14 + $0x50] sm:$0xf]
    %v622 = vld [vmem:[#allocation14 + $0x54] sm:$0xff]
    %v623 = vld [vmem:[#allocation14 + $0x5c] sm:$0xf]
    %v624 = vld [vmem:[#allocation14 + $0x60] sm:$0xff]
    %v625 = vld [vmem:[#allocation14 + $0x68] sm:$0xf]
    %v626 = vld [vmem:[#allocation14 + $0x6c] sm:$0xff]
    %v627 = vld [vmem:[#allocation14 + $0x74] sm:$0xf]
    %v628 = vld [vmem:[#allocation14 + $0x78] sm:$0xff]
    %v629 = vld [vmem:[#allocation14 + $0x80] sm:$0xf]
    %v630 = vld [vmem:[#allocation14 + $0x84] sm:$0xff]
    %v631 = vld [vmem:[#allocation14 + $0x8c] sm:$0xf]
    %v632 = vld [vmem:[#allocation14 + $0x90] sm:$0xff]
    %v633 = vld [vmem:[#allocation14 + $0x98] sm:$0xf]
    %v634 = vld [vmem:[#allocation14 + $0x9c] sm:$0xff]
    %v635 = vld [vmem:[#allocation14 + $0xa4] sm:$0xf]
    %v636 = vld [vmem:[#allocation14 + $0xa8] sm:$0xff]
    %v637 = vld [vmem:[#allocation14 + $0xb0] sm:$0xf]
    %v638 = vld [vmem:[#allocation14 + $0xb4] sm:$0xff]
    %v639 = vld [vmem:[#allocation14 + $0xbc] sm:$0xf]
    %v672 = vunpack.c.l.b16 %v608
    %v673 = vunpack.c.h.b16 %v608
    %v674 = vunpack.c.l.b16 %v609
    %v675 = vunpack.c.l.b16 %v610
    %v676 = vunpack.c.h.b16 %v610
    %v677 = vunpack.c.l.b16 %v611
    %v678 = vunpack.c.l.b16 %v612
    %v679 = vunpack.c.h.b16 %v612
    %v680 = vunpack.c.l.b16 %v613
    %v681 = vunpack.c.l.b16 %v614
    %v682 = vunpack.c.h.b16 %v614
    %v683 = vunpack.c.l.b16 %v615
    %v684 = vunpack.c.l.b16 %v616
    %v685 = vunpack.c.h.b16 %v616
    %v686 = vunpack.c.l.b16 %v617
    %v687 = vunpack.c.l.b16 %v618
    %v688 = vunpack.c.h.b16 %v618
    %v689 = vunpack.c.l.b16 %v619
    %v690 = vunpack.c.l.b16 %v620
    %v691 = vunpack.c.h.b16 %v620
    %v692 = vunpack.c.l.b16 %v621
    %v693 = vunpack.c.l.b16 %v622
    %v694 = vunpack.c.h.b16 %v622
    %v695 = vunpack.c.l.b16 %v623
    %v696 = vunpack.c.l.b16 %v624
    %v697 = vunpack.c.h.b16 %v624
    %v698 = vunpack.c.l.b16 %v625
    %v699 = vunpack.c.l.b16 %v626
    %v700 = vunpack.c.h.b16 %v626
    %v701 = vunpack.c.l.b16 %v627
    %v702 = vunpack.c.l.b16 %v628
    %v703 = vunpack.c.h.b16 %v628
    %v704 = vunpack.c.l.b16 %v629
    %v705 = vunpack.c.l.b16 %v630
    %v706 = vunpack.c.h.b16 %v630
    %v707 = vunpack.c.l.b16 %v631
    %v708 = vunpack.c.l.b16 %v632
    %v709 = vunpack.c.h.b16 %v632
    %v710 = vunpack.c.l.b16 %v633
    %v711 = vunpack.c.l.b16 %v634
    %v712 = vunpack.c.h.b16 %v634
    %v713 = vunpack.c.l.b16 %v635
    %v714 = vunpack.c.l.b16 %v636
    %v715 = vunpack.c.h.b16 %v636
    %v716 = vunpack.c.l.b16 %v637
    %v717 = vunpack.c.l.b16 %v638
    %v718 = vunpack.c.h.b16 %v638
    %v719 = vunpack.c.l.b16 %v639
    %v720 = vpack.c.b16 %v675, %v672
    %v721 = vpack.c.b16 %v676, %v673
    %v722 = vpack.c.b16 %v677, %v674
    %v723 = vpack.c.b16 %v681, %v678
    %v724 = vpack.c.b16 %v682, %v679
    %v725 = vpack.c.b16 %v683, %v680
    %v726 = vpack.c.b16 %v687, %v684
    %v727 = vpack.c.b16 %v688, %v685
    %v728 = vpack.c.b16 %v689, %v686
    %v729 = vpack.c.b16 %v693, %v690
    %v730 = vpack.c.b16 %v694, %v691
    %v731 = vpack.c.b16 %v695, %v692
    %v732 = vpack.c.b16 %v699, %v696
    %v733 = vpack.c.b16 %v700, %v697
    %v734 = vpack.c.b16 %v701, %v698
    %v735 = vpack.c.b16 %v705, %v702
    %v736 = vpack.c.b16 %v706, %v703
    %v737 = vpack.c.b16 %v707, %v704
    %v738 = vpack.c.b16 %v711, %v708
    %v739 = vpack.c.b16 %v712, %v709
    %v740 = vpack.c.b16 %v713, %v710
    %v741 = vpack.c.b16 %v717, %v714
    %v742 = vpack.c.b16 %v718, %v715
    %v743 = vpack.c.b16 %v719, %v716
    %768 = vmatpush.bf16.msra.mxu0 %v741
    %769 = vmatpush.bf16.msra.mxu0 %v738
    %770 = vmatpush.bf16.msra.mxu0 %v735
    %771 = vmatpush.bf16.msra.mxu0 %v732
    %772 = vmatpush.bf16.msra.mxu0 %v729
    %773 = vmatpush.bf16.msra.mxu0 %v726
    %774 = vmatpush.bf16.msra.mxu0 %v723
    %775 = vmatpush.bf16.msra.mxu0 %v720
    %776 = vmatmul.bf16.gmra.mxu0 %v607
    %v777 = vpop.f32.mrf.mxu0
    %v778 = vadd.f32 0.0, %v777
    %v779 = vpop.f32.mrf.mxu0
    %780 = vdwg.mxu0
    %781 = vmatpush.bf16.msra.mxu0 %v742
    %782 = vmatpush.bf16.msra.mxu0 %v739
    %783 = vmatpush.bf16.msra.mxu0 %v736
    %784 = vmatpush.bf16.msra.mxu0 %v733
    %785 = vmatpush.bf16.msra.mxu0 %v730
    %786 = vmatpush.bf16.msra.mxu0 %v727
    %787 = vmatpush.bf16.msra.mxu0 %v724
    %788 = vmatpush.bf16.msra.mxu0 %v721
    %789 = vmatmul.bf16.gmra.mxu0 %v607
    %v790 = vpop.f32.mrf.mxu0
    %v791 = vadd.f32 0.0, %v790
    %v792 = vpop.f32.mrf.mxu0
    %793 = vdwg.mxu0
    %794 = vmatpush.bf16.msra.mxu0 %v743
    %795 = vmatpush.bf16.msra.mxu0 %v740
    %796 = vmatpush.bf16.msra.mxu0 %v737
    %797 = vmatpush.bf16.msra.mxu0 %v734
    %798 = vmatpush.bf16.msra.mxu0 %v731
    %799 = vmatpush.bf16.msra.mxu0 %v728
    %800 = vmatpush.bf16.msra.mxu0 %v725
    %801 = vmatpush.bf16.msra.mxu0 %v722
    %802 = vmatmul.bf16.gmra.mxu0 %v607
    %v803 = vpop.f32.mrf.mxu0
    %v804 = vadd.f32 0.0, %v803
    %v805 = vpop.f32.mrf.mxu0
    %806 = vdwg.mxu0
    %v807 = vadd.f32 %v281, %v778
    %v808 = vadd.f32 %v294, %v791
    %v809 = vadd.f32 %v307, %v804
    %v810 = vxor.u32 %v807, 2147483648
    %v811 = vmul.f32 %v810, 1.442695
    %v812 = vpow.pop %v811
    %v813 = vadd.f32 %v812, 1.0
    %v814 = vrcp.pop %v813
    %v815 = vmul.f32 %v813, %v814
    %v816 = vsub.f32 1.0, %v815
    %v817 = vmul.f32 %v814, %v816
    %v818 = vadd.f32 %v814, %v817
    %vm819 = vweird.f32 %v813
    %vm820 = vweird.f32 %v814
    %vm821 = vmor %vm819, %vm820
    %v822 = vsel %vm821, %v814, %v818
    %v823 = vand.u32 2147483647, %v813
    %vm824 = vcmp.eq.f32.partialorder %v823, 8.507059e+37
    %v825 = vand.u32 %v813, 2147483648
    %v826 = vor.u32 1.1754944e-38, %v825
    %v827 = vsel %vm824, %v826, %v822
    %v828 = vmul.f32 1.0, %v827
    %v829 = vxor.u32 %v808, 2147483648
    %v830 = vmul.f32 %v829, 1.442695
    %v831 = vpow.pop %v830
    %v832 = vadd.f32 %v831, 1.0
    %v833 = vrcp.pop %v832
    %v834 = vmul.f32 %v832, %v833
    %v835 = vsub.f32 1.0, %v834
    %v836 = vmul.f32 %v833, %v835
    %v837 = vadd.f32 %v833, %v836
    %vm838 = vweird.f32 %v832
    %vm839 = vweird.f32 %v833
    %vm840 = vmor %vm838, %vm839
    %v841 = vsel %vm840, %v833, %v837
    %v842 = vand.u32 2147483647, %v832
    %vm843 = vcmp.eq.f32.partialorder %v842, 8.507059e+37
    %v844 = vand.u32 %v832, 2147483648
    %v845 = vor.u32 1.1754944e-38, %v844
    %v846 = vsel %vm843, %v845, %v841
    %v847 = vmul.f32 1.0, %v846
    %v848 = vtanh.pop %v809
    %v849 = vpack.c.bf16 %v268, %v268
    %850 = vxpose.xlu0.c.b16.start [1/8] %v196, 128
    %851 = vxpose.xlu0.c.b16.cont [2/8] 0, 128
    %852 = vxpose.xlu0.c.b16.cont [3/8] 0, 128
    %853 = vxpose.xlu0.c.b16.cont [4/8] 0, 128
    %854 = vxpose.xlu0.c.b16.cont [5/8] 0, 128
    %855 = vxpose.xlu0.c.b16.cont [6/8] 0, 128
    %856 = vxpose.xlu0.c.b16.cont [7/8] 0, 128
    %857 = vxpose.xlu0.c.b16.end [8/8] 0, 128
    %v858 = vpop.trf.xlu0
    %v859 = vpop.trf.xlu0
    %v860 = vpop.trf.xlu0
    %v861 = vpop.trf.xlu0
    %v862 = vpop.trf.xlu0
    %v863 = vpop.trf.xlu0
    %v864 = vpop.trf.xlu0
    %v865 = vpop.trf.xlu0
    %vm866 = vcmask 64512
    %v868 = vsel %vm866, %v858, 0
    %v871 = vsel %vm866, %v859, 0
    %v874 = vsel %vm866, %v860, 0
    %v877 = vsel %vm866, %v861, 0
    %v880 = vsel %vm866, %v862, 0
    %v883 = vsel %vm866, %v863, 0
    %v886 = vsel %vm866, %v864, 0
    %v889 = vsel %vm866, %v865, 0
    %vm891 = vcmask 1043456
    %v893 = vsel %vm891, %v849, 0
    %895 = vmatpush.bf16.msra.mxu0 0
    %896 = vmatpush.bf16.msra.mxu0 0
    %897 = vmatpush.bf16.msra.mxu0 0
    %898 = vmatpush.bf16.msra.mxu0 0
    %899 = vmatpush.bf16.msra.mxu0 0
    %900 = vmatpush.bf16.msra.mxu0 0
    %901 = vmatpush.bf16.msra.mxu0 0
    %902 = vmatpush.bf16.msra.mxu0 %v893
    %903 = vmatmul.bf16.gmra.mxu0 %v868
    %v904 = vpop.f32.mrf.mxu0
    %v905 = vadd.f32 0.0, %v904
    %v906 = vpop.f32.mrf.mxu0
    %v907 = vadd.f32 0.0, %v906
    %908 = vmatmul.bf16.gmra.mxu0 %v871
    %v909 = vpop.f32.mrf.mxu0
    %v910 = vadd.f32 0.0, %v909
    %v911 = vpop.f32.mrf.mxu0
    %v912 = vadd.f32 0.0, %v911
    %913 = vmatmul.bf16.gmra.mxu0 %v874
    %v914 = vpop.f32.mrf.mxu0
    %v915 = vadd.f32 0.0, %v914
    %v916 = vpop.f32.mrf.mxu0
    %v917 = vadd.f32 0.0, %v916
    %918 = vmatmul.bf16.gmra.mxu0 %v877
    %v919 = vpop.f32.mrf.mxu0
    %v920 = vadd.f32 0.0, %v919
    %v921 = vpop.f32.mrf.mxu0
    %v922 = vadd.f32 0.0, %v921
    %923 = vmatmul.bf16.gmra.mxu0 %v880
    %v924 = vpop.f32.mrf.mxu0
    %v925 = vadd.f32 0.0, %v924
    %v926 = vpop.f32.mrf.mxu0
    %v927 = vadd.f32 0.0, %v926
    %928 = vmatmul.bf16.gmra.mxu0 %v883
    %v929 = vpop.f32.mrf.mxu0
    %v930 = vadd.f32 0.0, %v929
    %v931 = vpop.f32.mrf.mxu0
    %v932 = vadd.f32 0.0, %v931
    %933 = vmatmul.bf16.gmra.mxu0 %v886
    %v934 = vpop.f32.mrf.mxu0
    %v935 = vadd.f32 0.0, %v934
    %v936 = vpop.f32.mrf.mxu0
    %v937 = vadd.f32 0.0, %v936
    %938 = vmatmul.bf16.gmra.mxu0 %v889
    %v939 = vpop.f32.mrf.mxu0
    %v940 = vadd.f32 0.0, %v939
    %v941 = vpop.f32.mrf.mxu0
    %v942 = vadd.f32 0.0, %v941
    %943 = vdwg.mxu0
    %v944 = vadd.f32 %v519, %v905
    %v945 = vadd.f32 %v521, %v907
    %v946 = vadd.f32 %v524, %v910
    %v947 = vadd.f32 %v526, %v912
    %v948 = vadd.f32 %v529, %v915
    %v949 = vadd.f32 %v531, %v917
    %v950 = vadd.f32 %v534, %v920
    %v951 = vadd.f32 %v536, %v922
    %v952 = vadd.f32 %v539, %v925
    %v953 = vadd.f32 %v541, %v927
    %v954 = vadd.f32 %v544, %v930
    %v955 = vadd.f32 %v546, %v932
    %v956 = vadd.f32 %v549, %v935
    %v957 = vadd.f32 %v551, %v937
    %v958 = vadd.f32 %v554, %v940
    %v959 = vadd.f32 %v556, %v942
    %v960 = vxor.u32 %v944, 2147483648
    %v961 = vxor.u32 %v945, 2147483648
    %v962 = vxor.u32 %v946, 2147483648
    %v963 = vxor.u32 %v947, 2147483648
    %v964 = vxor.u32 %v948, 2147483648
    %v965 = vxor.u32 %v949, 2147483648
    %v966 = vxor.u32 %v950, 2147483648
    %v967 = vxor.u32 %v951, 2147483648
    %v968 = vxor.u32 %v952, 2147483648
    %v969 = vxor.u32 %v953, 2147483648
    %v970 = vxor.u32 %v954, 2147483648
    %v971 = vxor.u32 %v955, 2147483648
    %v972 = vxor.u32 %v956, 2147483648
    %v973 = vxor.u32 %v957, 2147483648
    %v974 = vxor.u32 %v958, 2147483648
    %v975 = vxor.u32 %v959, 2147483648
    %v976 = vmul.f32 %v960, 1.442695
    %v977 = vpow.pop %v976
    %v978 = vmul.f32 %v961, 1.442695
    %v979 = vpow.pop %v978
    %v980 = vmul.f32 %v962, 1.442695
    %v981 = vpow.pop %v980
    %v982 = vmul.f32 %v963, 1.442695
    %v983 = vpow.pop %v982
    %v984 = vmul.f32 %v964, 1.442695
    %v985 = vpow.pop %v984
    %v986 = vmul.f32 %v965, 1.442695
    %v987 = vpow.pop %v986
    %v988 = vmul.f32 %v966, 1.442695
    %v989 = vpow.pop %v988
    %v990 = vmul.f32 %v967, 1.442695
    %v991 = vpow.pop %v990
    %v992 = vmul.f32 %v968, 1.442695
    %v993 = vpow.pop %v992
    %v994 = vmul.f32 %v969, 1.442695
    %v995 = vpow.pop %v994
    %v996 = vmul.f32 %v970, 1.442695
    %v997 = vpow.pop %v996
    %v998 = vmul.f32 %v971, 1.442695
    %v999 = vpow.pop %v998
    %v1000 = vmul.f32 %v972, 1.442695
    %v1001 = vpow.pop %v1000
    %v1002 = vmul.f32 %v973, 1.442695
    %v1003 = vpow.pop %v1002
    %v1004 = vmul.f32 %v974, 1.442695
    %v1005 = vpow.pop %v1004
    %v1006 = vmul.f32 %v975, 1.442695
    %v1007 = vpow.pop %v1006
    %v1008 = vadd.f32 %v977, 1.0
    %v1009 = vadd.f32 %v979, 1.0
    %v1010 = vadd.f32 %v981, 1.0
    %v1011 = vadd.f32 %v983, 1.0
    %v1012 = vadd.f32 %v985, 1.0
    %v1013 = vadd.f32 %v987, 1.0
    %v1014 = vadd.f32 %v989, 1.0
    %v1015 = vadd.f32 %v991, 1.0
    %v1016 = vadd.f32 %v993, 1.0
    %v1017 = vadd.f32 %v995, 1.0
    %v1018 = vadd.f32 %v997, 1.0
    %v1019 = vadd.f32 %v999, 1.0
    %v1020 = vadd.f32 %v1001, 1.0
    %v1021 = vadd.f32 %v1003, 1.0
    %v1022 = vadd.f32 %v1005, 1.0
    %v1023 = vadd.f32 %v1007, 1.0
    %v1024 = vrcp.pop %v1008
    %v1025 = vmul.f32 %v1008, %v1024
    %v1026 = vsub.f32 1.0, %v1025
    %v1027 = vmul.f32 %v1024, %v1026
    %v1028 = vadd.f32 %v1024, %v1027
    %vm1029 = vweird.f32 %v1008
    %vm1030 = vweird.f32 %v1024
    %vm1031 = vmor %vm1029, %vm1030
    %v1032 = vsel %vm1031, %v1024, %v1028
    %v1033 = vand.u32 2147483647, %v1008
    %vm1034 = vcmp.eq.f32.partialorder %v1033, 8.507059e+37
    %v1035 = vand.u32 %v1008, 2147483648
    %v1036 = vor.u32 1.1754944e-38, %v1035
    %v1037 = vsel %vm1034, %v1036, %v1032
    %v1038 = vmul.f32 1.0, %v1037
    %v1039 = vrcp.pop %v1009
    %v1040 = vmul.f32 %v1009, %v1039
    %v1041 = vsub.f32 1.0, %v1040
    %v1042 = vmul.f32 %v1039, %v1041
    %v1043 = vadd.f32 %v1039, %v1042
    %vm1044 = vweird.f32 %v1009
    %vm1045 = vweird.f32 %v1039
    %vm1046 = vmor %vm1044, %vm1045
    %v1047 = vsel %vm1046, %v1039, %v1043
    %v1048 = vand.u32 2147483647, %v1009
    %vm1049 = vcmp.eq.f32.partialorder %v1048, 8.507059e+37
    %v1050 = vand.u32 %v1009, 2147483648
    %v1051 = vor.u32 1.1754944e-38, %v1050
    %v1052 = vsel %vm1049, %v1051, %v1047
    %v1053 = vmul.f32 1.0, %v1052
    %v1054 = vrcp.pop %v1010
    %v1055 = vmul.f32 %v1010, %v1054
    %v1056 = vsub.f32 1.0, %v1055
    %v1057 = vmul.f32 %v1054, %v1056
    %v1058 = vadd.f32 %v1054, %v1057
    %vm1059 = vweird.f32 %v1010
    %vm1060 = vweird.f32 %v1054
    %vm1061 = vmor %vm1059, %vm1060
    %v1062 = vsel %vm1061, %v1054, %v1058
    %v1063 = vand.u32 2147483647, %v1010
    %vm1064 = vcmp.eq.f32.partialorder %v1063, 8.507059e+37
    %v1065 = vand.u32 %v1010, 2147483648
    %v1066 = vor.u32 1.1754944e-38, %v1065
    %v1067 = vsel %vm1064, %v1066, %v1062
    %v1068 = vmul.f32 1.0, %v1067
    %v1069 = vrcp.pop %v1011
    %v1070 = vmul.f32 %v1011, %v1069
    %v1071 = vsub.f32 1.0, %v1070
    %v1072 = vmul.f32 %v1069, %v1071
    %v1073 = vadd.f32 %v1069, %v1072
    %vm1074 = vweird.f32 %v1011
    %vm1075 = vweird.f32 %v1069
    %vm1076 = vmor %vm1074, %vm1075
    %v1077 = vsel %vm1076, %v1069, %v1073
    %v1078 = vand.u32 2147483647, %v1011
    %vm1079 = vcmp.eq.f32.partialorder %v1078, 8.507059e+37
    %v1080 = vand.u32 %v1011, 2147483648
    %v1081 = vor.u32 1.1754944e-38, %v1080
    %v1082 = vsel %vm1079, %v1081, %v1077
    %v1083 = vmul.f32 1.0, %v1082
    %v1084 = vrcp.pop %v1012
    %v1085 = vmul.f32 %v1012, %v1084
    %v1086 = vsub.f32 1.0, %v1085
    %v1087 = vmul.f32 %v1084, %v1086
    %v1088 = vadd.f32 %v1084, %v1087
    %vm1089 = vweird.f32 %v1012
    %vm1090 = vweird.f32 %v1084
    %vm1091 = vmor %vm1089, %vm1090
    %v1092 = vsel %vm1091, %v1084, %v1088
    %v1093 = vand.u32 2147483647, %v1012
    %vm1094 = vcmp.eq.f32.partialorder %v1093, 8.507059e+37
    %v1095 = vand.u32 %v1012, 2147483648
    %v1096 = vor.u32 1.1754944e-38, %v1095
    %v1097 = vsel %vm1094, %v1096, %v1092
    %v1098 = vmul.f32 1.0, %v1097
    %v1099 = vrcp.pop %v1013
    %v1100 = vmul.f32 %v1013, %v1099
    %v1101 = vsub.f32 1.0, %v1100
    %v1102 = vmul.f32 %v1099, %v1101
    %v1103 = vadd.f32 %v1099, %v1102
    %vm1104 = vweird.f32 %v1013
    %vm1105 = vweird.f32 %v1099
    %vm1106 = vmor %vm1104, %vm1105
    %v1107 = vsel %vm1106, %v1099, %v1103
    %v1108 = vand.u32 2147483647, %v1013
    %vm1109 = vcmp.eq.f32.partialorder %v1108, 8.507059e+37
    %v1110 = vand.u32 %v1013, 2147483648
    %v1111 = vor.u32 1.1754944e-38, %v1110
    %v1112 = vsel %vm1109, %v1111, %v1107
    %v1113 = vmul.f32 1.0, %v1112
    %v1114 = vrcp.pop %v1014
    %v1115 = vmul.f32 %v1014, %v1114
    %v1116 = vsub.f32 1.0, %v1115
    %v1117 = vmul.f32 %v1114, %v1116
    %v1118 = vadd.f32 %v1114, %v1117
    %vm1119 = vweird.f32 %v1014
    %vm1120 = vweird.f32 %v1114
    %vm1121 = vmor %vm1119, %vm1120
    %v1122 = vsel %vm1121, %v1114, %v1118
    %v1123 = vand.u32 2147483647, %v1014
    %vm1124 = vcmp.eq.f32.partialorder %v1123, 8.507059e+37
    %v1125 = vand.u32 %v1014, 2147483648
    %v1126 = vor.u32 1.1754944e-38, %v1125
    %v1127 = vsel %vm1124, %v1126, %v1122
    %v1128 = vmul.f32 1.0, %v1127
    %v1129 = vrcp.pop %v1015
    %v1130 = vmul.f32 %v1015, %v1129
    %v1131 = vsub.f32 1.0, %v1130
    %v1132 = vmul.f32 %v1129, %v1131
    %v1133 = vadd.f32 %v1129, %v1132
    %vm1134 = vweird.f32 %v1015
    %vm1135 = vweird.f32 %v1129
    %vm1136 = vmor %vm1134, %vm1135
    %v1137 = vsel %vm1136, %v1129, %v1133
    %v1138 = vand.u32 2147483647, %v1015
    %vm1139 = vcmp.eq.f32.partialorder %v1138, 8.507059e+37
    %v1140 = vand.u32 %v1015, 2147483648
    %v1141 = vor.u32 1.1754944e-38, %v1140
    %v1142 = vsel %vm1139, %v1141, %v1137
    %v1143 = vmul.f32 1.0, %v1142
    %v1144 = vrcp.pop %v1016
    %v1145 = vmul.f32 %v1016, %v1144
    %v1146 = vsub.f32 1.0, %v1145
    %v1147 = vmul.f32 %v1144, %v1146
    %v1148 = vadd.f32 %v1144, %v1147
    %vm1149 = vweird.f32 %v1016
    %vm1150 = vweird.f32 %v1144
    %vm1151 = vmor %vm1149, %vm1150
    %v1152 = vsel %vm1151, %v1144, %v1148
    %v1153 = vand.u32 2147483647, %v1016
    %vm1154 = vcmp.eq.f32.partialorder %v1153, 8.507059e+37
    %v1155 = vand.u32 %v1016, 2147483648
    %v1156 = vor.u32 1.1754944e-38, %v1155
    %v1157 = vsel %vm1154, %v1156, %v1152
    %v1158 = vmul.f32 1.0, %v1157
    %v1159 = vrcp.pop %v1017
    %v1160 = vmul.f32 %v1017, %v1159
    %v1161 = vsub.f32 1.0, %v1160
    %v1162 = vmul.f32 %v1159, %v1161
    %v1163 = vadd.f32 %v1159, %v1162
    %vm1164 = vweird.f32 %v1017
    %vm1165 = vweird.f32 %v1159
    %vm1166 = vmor %vm1164, %vm1165
    %v1167 = vsel %vm1166, %v1159, %v1163
    %v1168 = vand.u32 2147483647, %v1017
    %vm1169 = vcmp.eq.f32.partialorder %v1168, 8.507059e+37
    %v1170 = vand.u32 %v1017, 2147483648
    %v1171 = vor.u32 1.1754944e-38, %v1170
    %v1172 = vsel %vm1169, %v1171, %v1167
    %v1173 = vmul.f32 1.0, %v1172
    %v1174 = vrcp.pop %v1018
    %v1175 = vmul.f32 %v1018, %v1174
    %v1176 = vsub.f32 1.0, %v1175
    %v1177 = vmul.f32 %v1174, %v1176
    %v1178 = vadd.f32 %v1174, %v1177
    %vm1179 = vweird.f32 %v1018
    %vm1180 = vweird.f32 %v1174
    %vm1181 = vmor %vm1179, %vm1180
    %v1182 = vsel %vm1181, %v1174, %v1178
    %v1183 = vand.u32 2147483647, %v1018
    %vm1184 = vcmp.eq.f32.partialorder %v1183, 8.507059e+37
    %v1185 = vand.u32 %v1018, 2147483648
    %v1186 = vor.u32 1.1754944e-38, %v1185
    %v1187 = vsel %vm1184, %v1186, %v1182
    %v1188 = vmul.f32 1.0, %v1187
    %v1189 = vrcp.pop %v1019
    %v1190 = vmul.f32 %v1019, %v1189
    %v1191 = vsub.f32 1.0, %v1190
    %v1192 = vmul.f32 %v1189, %v1191
    %v1193 = vadd.f32 %v1189, %v1192
    %vm1194 = vweird.f32 %v1019
    %vm1195 = vweird.f32 %v1189
    %vm1196 = vmor %vm1194, %vm1195
    %v1197 = vsel %vm1196, %v1189, %v1193
    %v1198 = vand.u32 2147483647, %v1019
    %vm1199 = vcmp.eq.f32.partialorder %v1198, 8.507059e+37
    %v1200 = vand.u32 %v1019, 2147483648
    %v1201 = vor.u32 1.1754944e-38, %v1200
    %v1202 = vsel %vm1199, %v1201, %v1197
    %v1203 = vmul.f32 1.0, %v1202
    %v1204 = vrcp.pop %v1020
    %v1205 = vmul.f32 %v1020, %v1204
    %v1206 = vsub.f32 1.0, %v1205
    %v1207 = vmul.f32 %v1204, %v1206
    %v1208 = vadd.f32 %v1204, %v1207
    %vm1209 = vweird.f32 %v1020
    %vm1210 = vweird.f32 %v1204
    %vm1211 = vmor %vm1209, %vm1210
    %v1212 = vsel %vm1211, %v1204, %v1208
    %v1213 = vand.u32 2147483647, %v1020
    %vm1214 = vcmp.eq.f32.partialorder %v1213, 8.507059e+37
    %v1215 = vand.u32 %v1020, 2147483648
    %v1216 = vor.u32 1.1754944e-38, %v1215
    %v1217 = vsel %vm1214, %v1216, %v1212
    %v1218 = vmul.f32 1.0, %v1217
    %v1219 = vrcp.pop %v1021
    %v1220 = vmul.f32 %v1021, %v1219
    %v1221 = vsub.f32 1.0, %v1220
    %v1222 = vmul.f32 %v1219, %v1221
    %v1223 = vadd.f32 %v1219, %v1222
    %vm1224 = vweird.f32 %v1021
    %vm1225 = vweird.f32 %v1219
    %vm1226 = vmor %vm1224, %vm1225
    %v1227 = vsel %vm1226, %v1219, %v1223
    %v1228 = vand.u32 2147483647, %v1021
    %vm1229 = vcmp.eq.f32.partialorder %v1228, 8.507059e+37
    %v1230 = vand.u32 %v1021, 2147483648
    %v1231 = vor.u32 1.1754944e-38, %v1230
    %v1232 = vsel %vm1229, %v1231, %v1227
    %v1233 = vmul.f32 1.0, %v1232
    %v1234 = vrcp.pop %v1022
    %v1235 = vmul.f32 %v1022, %v1234
    %v1236 = vsub.f32 1.0, %v1235
    %v1237 = vmul.f32 %v1234, %v1236
    %v1238 = vadd.f32 %v1234, %v1237
    %vm1239 = vweird.f32 %v1022
    %vm1240 = vweird.f32 %v1234
    %vm1241 = vmor %vm1239, %vm1240
    %v1242 = vsel %vm1241, %v1234, %v1238
    %v1243 = vand.u32 2147483647, %v1022
    %vm1244 = vcmp.eq.f32.partialorder %v1243, 8.507059e+37
    %v1245 = vand.u32 %v1022, 2147483648
    %v1246 = vor.u32 1.1754944e-38, %v1245
    %v1247 = vsel %vm1244, %v1246, %v1242
    %v1248 = vmul.f32 1.0, %v1247
    %v1249 = vrcp.pop %v1023
    %v1250 = vmul.f32 %v1023, %v1249
    %v1251 = vsub.f32 1.0, %v1250
    %v1252 = vmul.f32 %v1249, %v1251
    %v1253 = vadd.f32 %v1249, %v1252
    %vm1254 = vweird.f32 %v1023
    %vm1255 = vweird.f32 %v1249
    %vm1256 = vmor %vm1254, %vm1255
    %v1257 = vsel %vm1256, %v1249, %v1253
    %v1258 = vand.u32 2147483647, %v1023
    %vm1259 = vcmp.eq.f32.partialorder %v1258, 8.507059e+37
    %v1260 = vand.u32 %v1023, 2147483648
    %v1261 = vor.u32 1.1754944e-38, %v1260
    %v1262 = vsel %vm1259, %v1261, %v1257
    %v1263 = vmul.f32 1.0, %v1262
    %v1264 = vunpack.c.l.bf16 %v170
    %v1265 = vunpack.c.l.bf16 %v171
    %v1266 = vunpack.c.l.bf16 %v172
    %v1267 = vunpack.c.l.bf16 %v173
    %v1268 = vunpack.c.l.bf16 %v174
    %v1269 = vunpack.c.l.bf16 %v175
    %v1270 = vunpack.c.l.bf16 %v176
    %v1271 = vunpack.c.l.bf16 %v177
    %v1272 = vunpack.c.l.bf16 %v178
    %v1273 = vunpack.c.l.bf16 %v179
    %v1274 = vunpack.c.l.bf16 %v180
    %v1275 = vunpack.c.l.bf16 %v181
    %v1276 = vunpack.c.l.bf16 %v182
    %v1277 = vunpack.c.l.bf16 %v183
    %v1278 = vunpack.c.l.bf16 %v184
    %v1279 = vunpack.c.l.bf16 %v185
    %v1280 = vmul.f32 %v1038, %v1264
    %v1281 = vmul.f32 %v1053, %v1265
    %v1282 = vmul.f32 %v1068, %v1266
    %v1283 = vmul.f32 %v1083, %v1267
    %v1284 = vmul.f32 %v1098, %v1268
    %v1285 = vmul.f32 %v1113, %v1269
    %v1286 = vmul.f32 %v1128, %v1270
    %v1287 = vmul.f32 %v1143, %v1271
    %v1288 = vmul.f32 %v1158, %v1272
    %v1289 = vmul.f32 %v1173, %v1273
    %v1290 = vmul.f32 %v1188, %v1274
    %v1291 = vmul.f32 %v1203, %v1275
    %v1292 = vmul.f32 %v1218, %v1276
    %v1293 = vmul.f32 %v1233, %v1277
    %v1294 = vmul.f32 %v1248, %v1278
    %v1295 = vmul.f32 %v1263, %v1279
    %v1296 = vpack.c.bf16 %v1281, %v1280
    %v1297 = vpack.c.bf16 %v1283, %v1282
    %v1298 = vpack.c.bf16 %v1285, %v1284
    %v1299 = vpack.c.bf16 %v1287, %v1286
    %v1300 = vpack.c.bf16 %v1289, %v1288
    %v1301 = vpack.c.bf16 %v1291, %v1290
    %v1302 = vpack.c.bf16 %v1293, %v1292
    %v1303 = vpack.c.bf16 %v1295, %v1294
    %1304 = vmatpush.bf16.msra.mxu0 %v1303
    %1305 = vmatpush.bf16.msra.mxu0 %v1302
    %1306 = vmatpush.bf16.msra.mxu0 %v1301
    %1307 = vmatpush.bf16.msra.mxu0 %v1300
    %1308 = vmatpush.bf16.msra.mxu0 %v1299
    %1309 = vmatpush.bf16.msra.mxu0 %v1298
    %1310 = vmatpush.bf16.msra.mxu0 %v1297
    %1311 = vmatpush.bf16.msra.mxu0 %v1296
    %1312 = vmatmul.bf16.gmra.mxu0 %v196
    %v1313 = vpop.f32.mrf.mxu0
    %v1314 = vadd.f32 0.0, %v1313
    %v1315 = vpop.f32.mrf.mxu0
    %1316 = vdwg.mxu0
    %v1317 = vmul.f32 %v828, %v848
    %v1318 = vadd.f32 %v1317, %v1314
    %v1319 = vtanh.pop %v1318
    %v1320 = vmul.f32 %v847, %v1319
    %1321 = vst [vmem:[#allocation16] sm:$0xff] %v1320
    %1322 = vst [vmem:[#allocation16 + $0x8] sm:$0xff] %v1318
    // Predicated region
    $region70: #{tpu_custom_call.1} parent=1 // pred_check
      _
    $region71: #{tpu_custom_call.1} parent=1 // pred_check_branch
      %1324 = sbr.rel (0) target = $region73
    $region72: #{tpu_custom_call.1} parent=1 // pred_region
      %1326 = vsyncadd [#allocation4], 0
      %s1328 = sshll.u32 [#allocation16], 4
      %s1329 = int_to_ptr.vmem [resolvable:$true] %s1328
      %s1330 = sshll.u32 %s9, 4
      %s1331 = int_to_ptr.hbm [resolvable:$true] %s1330
      %1333 = dma.vmem_to_hbm [thread:$0]  %s1329, 256, %s1331, [#allocation4]
    $region73: #{tpu_custom_call.1} parent=1 // pred_fallthru
      _
    // Predicated region
    $region74: #{tpu_custom_call.1} parent=1 // pred_check
      _
    $region75: #{tpu_custom_call.1} parent=1 // pred_check_branch
      %1335 = sbr.rel (0) target = $region77
    $region76: #{tpu_custom_call.1} parent=1 // pred_region
      %1337 = dma.done [#allocation4], 256
    $region77: #{tpu_custom_call.1} parent=1 // pred_fallthru
      _
    %1338 = vsyncpa [#allocation3], 1
    %1339 = vsyncpa [#allocation6], 1
    %1340 = vsyncpa [#allocation9], 1
    %1341 = vsyncpa [#allocation12], 1
    %1342 = vsyncpa [#allocation15], 1
    %1343 = vsyncpa [#allocation4], 1

</llo_original>
